<compile_context>
chip_gen: v7x
topology: tpu7x:2x2x1
jax: 0.10.0
libtpu: 0.0.40
codegen_flags: <defaults>
</compile_context>

<pallas_src>
import jax
import jax.numpy as jnp
from jax.experimental import pallas as pl
from jax.experimental.pallas import tpu as pltpu

INPUT_DIM = 32
OUTPUT_DIM = 8
HIDDEN = (256, 512, 512)

MAX_TB = 1024  # batch tile cap; per-step footprint a few MiB -> safe on v7x too


def _pdqn_kernel(x_ref,
                 w1_ref, b1_ref,
                 w2_ref, b2_ref,
                 w3_ref, b3_ref,
                 w4_ref, b4_ref,
                 out_ref):
    # Layer 1: Linear(32, 256) + ReLU   (bf16 MXU operands, f32 accumulate,
    # bias+ReLU in bf16 -> feeds next matmul directly)
    x = x_ref[...].astype(jnp.bfloat16)
    h = jnp.dot(x, w1_ref[...], preferred_element_type=jnp.float32)
    h = jnp.maximum(h.astype(jnp.bfloat16) + b1_ref[...], 0)
    # Layer 2: Linear(256, 512) + ReLU
    h = jnp.dot(h, w2_ref[...], preferred_element_type=jnp.float32)
    h = jnp.maximum(h.astype(jnp.bfloat16) + b2_ref[...], 0)
    # Layer 3: Linear(512, 512) + ReLU
    h = jnp.dot(h, w3_ref[...], preferred_element_type=jnp.float32)
    h = jnp.maximum(h.astype(jnp.bfloat16) + b3_ref[...], 0)
    # Layer 4: Linear(512, 8) -> Q-values, kept in f32 (accumulate + bias + store)
    q = jnp.dot(h, w4_ref[...], preferred_element_type=jnp.float32)
    out_ref[...] = (q + b4_ref[...]).astype(out_ref.dtype)


def _round_up(x, m):
    return (x + m - 1) // m * m


def _prepare_params(params):
    """Cast weights + layers 1-3 biases to bf16; keep layer-4 bias in f32."""
    (w1, b1), (w2, b2), (w3, b3), (w4, b4) = params
    return (w1.astype(jnp.bfloat16), b1.astype(jnp.bfloat16),
            w2.astype(jnp.bfloat16), b2.astype(jnp.bfloat16),
            w3.astype(jnp.bfloat16), b3.astype(jnp.bfloat16),
            w4.astype(jnp.bfloat16), b4.astype(jnp.float32))


def pdqn_forward(obs, params):
    """Pallas implementation of PDQN.forward(obs)."""
    x = obs.reshape(-1, INPUT_DIM).astype(jnp.float32)
    b = x.shape[0]

    # Balanced batch tiling: round batch to a multiple of 16, pick the smallest
    # number of tiles that respects MAX_TB (forced >= 2 when possible so both
    # v7x TensorCores are used), then balance tb so b_pad barely exceeds b.
    b16 = _round_up(max(b, 1), 16)
    num_tiles = -(-b16 // MAX_TB)
    if b16 >= 32:
        num_tiles = max(num_tiles, 2)
    tb = _round_up(-(-b16 // num_tiles), 16)
    b_pad = _round_up(b16, tb)

    if b_pad != b:
        x = jnp.pad(x, ((0, b_pad - b), (0, 0)))

    flat = _prepare_params(params)  # w1,b1,w2,b2,w3,b3,w4,b4

    # Weights/biases: full-array blocks with constant index maps -> VMEM-resident
    # across the batch grid; only x/out tiles stream (double-buffered by Pallas).
    def const_spec(arr):
        return pl.BlockSpec(arr.shape, lambda i: (0,) * arr.ndim)

    flops = 2 * b_pad * (INPUT_DIM * HIDDEN[0] + HIDDEN[0] * HIDDEN[1]
                         + HIDDEN[1] * HIDDEN[2] + HIDDEN[2] * OUTPUT_DIM)
    bytes_accessed = (b_pad * INPUT_DIM * 4
                      + sum(int(p.size) * p.dtype.itemsize for p in flat)
                      + b_pad * OUTPUT_DIM * 4)

    out = pl.pallas_call(
        _pdqn_kernel,
        out_shape=jax.ShapeDtypeStruct((b_pad, OUTPUT_DIM), jnp.float32),
        grid=(b_pad // tb,),
        in_specs=[pl.BlockSpec((tb, INPUT_DIM), lambda i: (i, 0))]
                 + [const_spec(p) for p in flat],
        out_specs=pl.BlockSpec((tb, OUTPUT_DIM), lambda i: (i, 0)),
        compiler_params=pltpu.CompilerParams(
            dimension_semantics=("parallel",)),
        cost_estimate=pl.CostEstimate(
            flops=flops, transcendentals=0, bytes_accessed=bytes_accessed),
    )(x, *flat)

    return out[:b] if b_pad != b else out


def init_pdqn_params(key, input_dim=INPUT_DIM, output_dim=OUTPUT_DIM):
    """Deterministic init mimicking PyTorch Linear default (uniform +/- 1/sqrt(fan_in)).
    Weights are stored as (in_features, out_features)."""
    dims = [input_dim, *HIDDEN, output_dim]
    params = []
    for i in range(len(dims) - 1):
        fan_in, fan_out = dims[i], dims[i + 1]
        key, kw, kb = jax.random.split(key, 3)
        bound = 1.0 / (fan_in ** 0.5)
        w = jax.random.uniform(kw, (fan_in, fan_out), jnp.float32, -bound, bound)
        bias = jax.random.uniform(kb, (1, fan_out), jnp.float32, -bound, bound)
        params.append((w, bias))
    return params


def pdqn_forward_ref(obs, params):
    """Pure-JAX f32 reference of the same forward pass (for correctness check)."""
    x = obs.reshape(-1, INPUT_DIM).astype(jnp.float32)
    (w1, b1), (w2, b2), (w3, b3), (w4, b4) = params
    h = jnp.maximum(x @ w1 + b1, 0.0)
    h = jnp.maximum(h @ w2 + b2, 0.0)
    h = jnp.maximum(h @ w3 + b3, 0.0)
    return h @ w4 + b4


if __name__ == "__main__":
    key = jax.random.PRNGKey(0)
    key_params, key_obs1, key_obs2 = jax.random.split(key, 3)

    params = init_pdqn_params(key_params)
    fwd = jax.jit(pdqn_forward)

    # Case 1: obs with extra leading dims, as PDQN.forward does obs.view(-1, input_dim)
    obs = jax.random.normal(key_obs1, (2, 4, 8), dtype=jnp.float32)  # 4*8 = input_dim
    qvals = fwd(obs, params)
    jax.block_until_ready(qvals)
    ref = pdqn_forward_ref(obs, params)
    assert qvals.shape == (2, OUTPUT_DIM)
    assert jnp.allclose(qvals, ref, atol=5e-2, rtol=5e-2), (
        float(jnp.max(jnp.abs(qvals - ref))))

    # Case 2: batch that needs row padding and exercises a multi-step grid.
    obs2 = jax.random.normal(key_obs2, (37, INPUT_DIM), dtype=jnp.float32)
    qvals2 = fwd(obs2, params)
    jax.block_until_ready(qvals2)
    ref2 = pdqn_forward_ref(obs2, params)
    assert qvals2.shape == (37, OUTPUT_DIM)
    # Kernel runs bf16 matmul operands / bf16 bias+ReLU with f32 accumulation ->
    # looser tolerance than the pure-f32 reference.
    assert jnp.allclose(qvals2, ref2, atol=5e-2, rtol=5e-2), (
        float(jnp.max(jnp.abs(qvals2 - ref2))))

    print("KERNEL_OK")
</pallas_src>

<mosaic_0001>
module attributes {stable_mosaic.version = 11 : i64} {
  func.func @_pdqn_kernel(%arg0: i32, %arg1: memref<16x32xf32, #tpu.memory_space<vmem>>, %arg2: memref<32x256xbf16, #tpu.memory_space<vmem>>, %arg3: memref<1x256xbf16, #tpu.memory_space<vmem>>, %arg4: memref<256x512xbf16, #tpu.memory_space<vmem>>, %arg5: memref<1x512xbf16, #tpu.memory_space<vmem>>, %arg6: memref<512x512xbf16, #tpu.memory_space<vmem>>, %arg7: memref<1x512xbf16, #tpu.memory_space<vmem>>, %arg8: memref<512x8xbf16, #tpu.memory_space<vmem>>, %arg9: memref<1x8xf32, #tpu.memory_space<vmem>>, %arg10: memref<16x8xf32, #tpu.memory_space<vmem>>) attributes {dimension_semantics = [#tpu.dimension_semantics<parallel>], iteration_bounds = array<i64: 1>, scalar_prefetch = 0 : i64, scratch_operands = 0 : i64, tpu.core_type = #tpu.core_type<tc>, window_params = [{transform_indices = @transform_0, window_bounds = array<i64: 16, 32>}, {pipeline_mode = #tpu.pipeline_mode<synchronous>, transform_indices = @transform_1, window_bounds = array<i64: 32, 256>}, {pipeline_mode = #tpu.pipeline_mode<synchronous>, transform_indices = @transform_2, window_bounds = array<i64: 1, 256>}, {pipeline_mode = #tpu.pipeline_mode<synchronous>, transform_indices = @transform_3, window_bounds = array<i64: 256, 512>}, {pipeline_mode = #tpu.pipeline_mode<synchronous>, transform_indices = @transform_4, window_bounds = array<i64: 1, 512>}, {pipeline_mode = #tpu.pipeline_mode<synchronous>, transform_indices = @transform_5, window_bounds = array<i64: 512, 512>}, {pipeline_mode = #tpu.pipeline_mode<synchronous>, transform_indices = @transform_6, window_bounds = array<i64: 1, 512>}, {pipeline_mode = #tpu.pipeline_mode<synchronous>, transform_indices = @transform_7, window_bounds = array<i64: 512, 8>}, {pipeline_mode = #tpu.pipeline_mode<synchronous>, transform_indices = @transform_8, window_bounds = array<i64: 1, 8>}, {transform_indices = @transform_9, window_bounds = array<i64: 16, 8>}]} {
    %c0 = arith.constant 0 : index
    %c0_0 = arith.constant 0 : index
    %0 = vector.load %arg1[%c0, %c0_0] : memref<16x32xf32, #tpu.memory_space<vmem>>, vector<16x32xf32>
    %1 = arith.truncf %0 : vector<16x32xf32> to vector<16x32xbf16>
    %c0_1 = arith.constant 0 : index
    %c0_2 = arith.constant 0 : index
    %2 = vector.load %arg2[%c0_1, %c0_2] : memref<32x256xbf16, #tpu.memory_space<vmem>>, vector<32x256xbf16>
    %cst = arith.constant dense<0.000000e+00> : vector<16x256xf32>
    %3 = tpu.matmul %1, %2, %cst {dimension_numbers = #tpu.dot_dimension_numbers<[1], [0], [0], [1], [0, 0, 1, 1], [], []>} : vector<16x32xbf16>, vector<32x256xbf16>, vector<16x256xf32> -> vector<16x256xf32>
    %4 = arith.truncf %3 : vector<16x256xf32> to vector<16x256xbf16>
    %c0_3 = arith.constant 0 : index
    %c0_4 = arith.constant 0 : index
    %5 = vector.load %arg3[%c0_3, %c0_4] : memref<1x256xbf16, #tpu.memory_space<vmem>>, vector<1x256xbf16>
    %6 = vector.broadcast %5 : vector<1x256xbf16> to vector<16x256xbf16>
    %7 = arith.addf %4, %6 : vector<16x256xbf16>
    %cst_5 = arith.constant 0.000000e+00 : bf16
    %8 = vector.broadcast %cst_5 : bf16 to vector<16x256xbf16>
    %9 = arith.maximumf %7, %8 : vector<16x256xbf16>
    %c0_6 = arith.constant 0 : index
    %c0_7 = arith.constant 0 : index
    %10 = vector.load %arg4[%c0_6, %c0_7] : memref<256x512xbf16, #tpu.memory_space<vmem>>, vector<256x512xbf16>
    %cst_8 = arith.constant dense<0.000000e+00> : vector<16x512xf32>
    %11 = tpu.matmul %9, %10, %cst_8 {dimension_numbers = #tpu.dot_dimension_numbers<[1], [0], [0], [1], [0, 0, 1, 1], [], []>} : vector<16x256xbf16>, vector<256x512xbf16>, vector<16x512xf32> -> vector<16x512xf32>
    %12 = arith.truncf %11 : vector<16x512xf32> to vector<16x512xbf16>
    %c0_9 = arith.constant 0 : index
    %c0_10 = arith.constant 0 : index
    %13 = vector.load %arg5[%c0_9, %c0_10] : memref<1x512xbf16, #tpu.memory_space<vmem>>, vector<1x512xbf16>
    %14 = vector.broadcast %13 : vector<1x512xbf16> to vector<16x512xbf16>
    %15 = arith.addf %12, %14 : vector<16x512xbf16>
    %cst_11 = arith.constant 0.000000e+00 : bf16
    %16 = vector.broadcast %cst_11 : bf16 to vector<16x512xbf16>
    %17 = arith.maximumf %15, %16 : vector<16x512xbf16>
    %c0_12 = arith.constant 0 : index
    %c0_13 = arith.constant 0 : index
    %18 = vector.load %arg6[%c0_12, %c0_13] : memref<512x512xbf16, #tpu.memory_space<vmem>>, vector<512x512xbf16>
    %cst_14 = arith.constant dense<0.000000e+00> : vector<16x512xf32>
    %19 = tpu.matmul %17, %18, %cst_14 {dimension_numbers = #tpu.dot_dimension_numbers<[1], [0], [0], [1], [0, 0, 1, 1], [], []>} : vector<16x512xbf16>, vector<512x512xbf16>, vector<16x512xf32> -> vector<16x512xf32>
    %20 = arith.truncf %19 : vector<16x512xf32> to vector<16x512xbf16>
    %c0_15 = arith.constant 0 : index
    %c0_16 = arith.constant 0 : index
    %21 = vector.load %arg7[%c0_15, %c0_16] : memref<1x512xbf16, #tpu.memory_space<vmem>>, vector<1x512xbf16>
    %22 = vector.broadcast %21 : vector<1x512xbf16> to vector<16x512xbf16>
    %23 = arith.addf %20, %22 : vector<16x512xbf16>
    %cst_17 = arith.constant 0.000000e+00 : bf16
    %24 = vector.broadcast %cst_17 : bf16 to vector<16x512xbf16>
    %25 = arith.maximumf %23, %24 : vector<16x512xbf16>
    %c0_18 = arith.constant 0 : index
    %c0_19 = arith.constant 0 : index
    %26 = vector.load %arg8[%c0_18, %c0_19] : memref<512x8xbf16, #tpu.memory_space<vmem>>, vector<512x8xbf16>
    %cst_20 = arith.constant dense<0.000000e+00> : vector<16x8xf32>
    %27 = tpu.matmul %25, %26, %cst_20 {dimension_numbers = #tpu.dot_dimension_numbers<[1], [0], [0], [1], [0, 0, 1, 1], [], []>} : vector<16x512xbf16>, vector<512x8xbf16>, vector<16x8xf32> -> vector<16x8xf32>
    %c0_21 = arith.constant 0 : index
    %c0_22 = arith.constant 0 : index
    %28 = vector.load %arg9[%c0_21, %c0_22] : memref<1x8xf32, #tpu.memory_space<vmem>>, vector<1x8xf32>
    %29 = vector.broadcast %28 : vector<1x8xf32> to vector<16x8xf32>
    %30 = arith.addf %27, %29 : vector<16x8xf32>
    %c0_23 = arith.constant 0 : index
    %c0_24 = arith.constant 0 : index
    %31 = vector.load %arg10[%c0_23, %c0_24] : memref<16x8xf32, #tpu.memory_space<vmem>>, vector<16x8xf32>
    tpu.vector_store %arg10[%c0_23, %c0_24], %30 {strides = array<i32>} : memref<16x8xf32, #tpu.memory_space<vmem>>, vector<16x8xf32>,
    return
  }
  func.func @transform_0(%arg0: i32) -> (i32, i32) {
    %c0_i32 = arith.constant 0 : i32
    %c0_i32_0 = arith.constant 0 : i32
    return %arg0, %c0_i32 : i32, i32
  }
  func.func @transform_1(%arg0: i32) -> (i32, i32) {
    %c0_i32 = arith.constant 0 : i32
    %c0_i32_0 = arith.constant 0 : i32
    %c0_i32_1 = arith.constant 0 : i32
    return %c0_i32, %c0_i32_0 : i32, i32
  }
  func.func @transform_2(%arg0: i32) -> (i32, i32) {
    %c0_i32 = arith.constant 0 : i32
    %c0_i32_0 = arith.constant 0 : i32
    %c0_i32_1 = arith.constant 0 : i32
    return %c0_i32, %c0_i32_0 : i32, i32
  }
  func.func @transform_3(%arg0: i32) -> (i32, i32) {
    %c0_i32 = arith.constant 0 : i32
    %c0_i32_0 = arith.constant 0 : i32
    %c0_i32_1 = arith.constant 0 : i32
    return %c0_i32, %c0_i32_0 : i32, i32
  }
  func.func @transform_4(%arg0: i32) -> (i32, i32) {
    %c0_i32 = arith.constant 0 : i32
    %c0_i32_0 = arith.constant 0 : i32
    %c0_i32_1 = arith.constant 0 : i32
    return %c0_i32, %c0_i32_0 : i32, i32
  }
  func.func @transform_5(%arg0: i32) -> (i32, i32) {
    %c0_i32 = arith.constant 0 : i32
    %c0_i32_0 = arith.constant 0 : i32
    %c0_i32_1 = arith.constant 0 : i32
    return %c0_i32, %c0_i32_0 : i32, i32
  }
  func.func @transform_6(%arg0: i32) -> (i32, i32) {
    %c0_i32 = arith.constant 0 : i32
    %c0_i32_0 = arith.constant 0 : i32
    %c0_i32_1 = arith.constant 0 : i32
    return %c0_i32, %c0_i32_0 : i32, i32
  }
  func.func @transform_7(%arg0: i32) -> (i32, i32) {
    %c0_i32 = arith.constant 0 : i32
    %c0_i32_0 = arith.constant 0 : i32
    %c0_i32_1 = arith.constant 0 : i32
    return %c0_i32, %c0_i32_0 : i32, i32
  }
  func.func @transform_8(%arg0: i32) -> (i32, i32) {
    %c0_i32 = arith.constant 0 : i32
    %c0_i32_0 = arith.constant 0 : i32
    %c0_i32_1 = arith.constant 0 : i32
    return %c0_i32, %c0_i32_0 : i32, i32
  }
  func.func @transform_9(%arg0: i32) -> (i32, i32) {
    %c0_i32 = arith.constant 0 : i32
    %c0_i32_0 = arith.constant 0 : i32
    return %arg0, %c0_i32 : i32, i32
  }
}

</mosaic_0001>

<llo_original>
// kernel: pdqn_forward.1
$region0: #{pdqn_forward.1}
  #allocation0 [shape = 'u32[]', space=smem, size = 0x4, offset = 0x4, fixed_abs, tag = 'smem constant byte address 0x4 - core index']
  #allocation1 [shape = 'u32[144,128]{1,0:T(1,128)}', space=vmem, size = 0x12000, scoped, tag = 'internal scratch']
  %s0 = inlined_call_operand.vmem [shape: f32[16,32], index: 0, kind: input, shape index: {}]
  %s1 = inlined_call_operand.vmem [shape: bf16[32,256], index: 1, kind: input, shape index: {}]
  %s2 = inlined_call_operand.vmem [shape: bf16[1,256], index: 2, kind: input, shape index: {}]
  %s3 = inlined_call_operand.vmem [shape: bf16[256,512], index: 3, kind: input, shape index: {}]
  %s4 = inlined_call_operand.vmem [shape: bf16[1,512], index: 4, kind: input, shape index: {}]
  %s5 = inlined_call_operand.vmem [shape: bf16[512,512], index: 5, kind: input, shape index: {}]
  %s6 = inlined_call_operand.vmem [shape: bf16[1,512], index: 6, kind: input, shape index: {}]
  %s7 = inlined_call_operand.vmem [shape: bf16[512,8], index: 7, kind: input, shape index: {}]
  %s8 = inlined_call_operand.vmem [shape: f32[1,8], index: 8, kind: input, shape index: {}]
  %s9 = inlined_call_operand.vmem [shape: f32[16,8], index: 9, kind: output, shape index: {}]
  %s10 = sld [smem:[#allocation0]]
  $region46: #{pdqn_forward.1} parent=0
    _
  %s12 = ssub.s32 1, %s10
  %s13 = scalar_select 0, %s12, %s10
  // Predicated region
  $region2: #{pdqn_forward.1} parent=0 // pred_check
    _
  $region3: #{pdqn_forward.1} parent=0 // pred_check_branch
    %15 = sbr.rel (0) target = $region5
  $region4: #{pdqn_forward.1} parent=0 // pred_region
    _
  $region5: #{pdqn_forward.1} parent=0 // pred_fallthru
    _
  // Predicated region
  $region6: #{pdqn_forward.1} parent=0 // pred_check
    _
  $region7: #{pdqn_forward.1} parent=0 // pred_check_branch
    %17 = sbr.rel (0) target = $region9
  $region8: #{pdqn_forward.1} parent=0 // pred_region
    _
  $region9: #{pdqn_forward.1} parent=0 // pred_fallthru
    _
  // Predicated region
  $region10: #{pdqn_forward.1} parent=0 // pred_check
    _
  $region11: #{pdqn_forward.1} parent=0 // pred_check_branch
    %19 = sbr.rel (0) target = $region13
  $region12: #{pdqn_forward.1} parent=0 // pred_region
    _
  $region13: #{pdqn_forward.1} parent=0 // pred_fallthru
    _
  // Predicated region
  $region14: #{pdqn_forward.1} parent=0 // pred_check
    _
  $region15: #{pdqn_forward.1} parent=0 // pred_check_branch
    %21 = sbr.rel (0) target = $region17
  $region16: #{pdqn_forward.1} parent=0 // pred_region
    _
  $region17: #{pdqn_forward.1} parent=0 // pred_fallthru
    _
  // Predicated region
  $region18: #{pdqn_forward.1} parent=0 // pred_check
    _
  $region19: #{pdqn_forward.1} parent=0 // pred_check_branch
    %23 = sbr.rel (0) target = $region21
  $region20: #{pdqn_forward.1} parent=0 // pred_region
    _
  $region21: #{pdqn_forward.1} parent=0 // pred_fallthru
    _
  // Predicated region
  $region22: #{pdqn_forward.1} parent=0 // pred_check
    _
  $region23: #{pdqn_forward.1} parent=0 // pred_check_branch
    %25 = sbr.rel (0) target = $region25
  $region24: #{pdqn_forward.1} parent=0 // pred_region
    _
  $region25: #{pdqn_forward.1} parent=0 // pred_fallthru
    _
  // Predicated region
  $region26: #{pdqn_forward.1} parent=0 // pred_check
    _
  $region27: #{pdqn_forward.1} parent=0 // pred_check_branch
    %27 = sbr.rel (0) target = $region29
  $region28: #{pdqn_forward.1} parent=0 // pred_region
    _
  $region29: #{pdqn_forward.1} parent=0 // pred_fallthru
    _
  // Predicated region
  $region30: #{pdqn_forward.1} parent=0 // pred_check
    _
  $region31: #{pdqn_forward.1} parent=0 // pred_check_branch
    %29 = sbr.rel (0) target = $region33
  $region32: #{pdqn_forward.1} parent=0 // pred_region
    _
  $region33: #{pdqn_forward.1} parent=0 // pred_fallthru
    _
  // Predicated region
  $region34: #{pdqn_forward.1} parent=0 // pred_check
    _
  $region35: #{pdqn_forward.1} parent=0 // pred_check_branch
    %31 = sbr.rel (0) target = $region37
  $region36: #{pdqn_forward.1} parent=0 // pred_region
    _
  $region37: #{pdqn_forward.1} parent=0 // pred_fallthru
    _
  %v33 = vld [vmem:[%s0] sm:$0xff]
  %v34 = vld [vmem:[%s0 + $0x8] sm:$0xff]
  %v35 = vpack.c.bf16 %v34, %v33
  %v36 = vld [vmem:[%s1] sm:$0xff]
  %v37 = vld [vmem:[%s1 + $0x8] sm:$0xff]
  %v38 = vld [vmem:[%s1 + $0x10] sm:$0xff]
  %v39 = vld [vmem:[%s1 + $0x18] sm:$0xff]
  %v44 = vunpack.c.l.b16 %v36
  %v45 = vunpack.c.h.b16 %v36
  %v46 = vunpack.c.l.b16 %v37
  %v47 = vunpack.c.h.b16 %v37
  %v48 = vunpack.c.l.b16 %v38
  %v49 = vunpack.c.h.b16 %v38
  %v50 = vunpack.c.l.b16 %v39
  %v51 = vunpack.c.h.b16 %v39
  %v52 = vpack.c.b16 %v46, %v44
  %v53 = vpack.c.b16 %v47, %v45
  %v54 = vpack.c.b16 %v50, %v48
  %v55 = vpack.c.b16 %v51, %v49
  %vm60 = vcmask 261120
  %v62 = vsel %vm60, %v35, 0
  %64 = vmatprep.subr.bf16.mxu0 %v53
  %65 = vmatpush1.bf16.msra.mxu0 %v52
  %66 = vmatprep.subr.bf16.mxu0 %v55
  %67 = vmatpush1.bf16.msra.mxu0 %v54
  %68 = vmatprep.subr.bf16.mxu0 0
  %69 = vmatpush1.bf16.msra.mxu0 0
  %70 = vmatprep.subr.bf16.mxu0 0
  %71 = vmatpush1.bf16.msra.mxu0 0
  %72 = vmatprep.subr.bf16.mxu0 0
  %73 = vmatpush1.bf16.msra.mxu0 0
  %74 = vmatprep.subr.bf16.mxu0 0
  %75 = vmatpush1.bf16.msra.mxu0 0
  %76 = vmatprep.subr.bf16.mxu0 0
  %77 = vmatpush1.bf16.msra.mxu0 0
  %78 = vmatprep.subr.bf16.mxu0 0
  %79 = vmatpush1.bf16.msra.mxu0 0
  %80 = vmatprep.subr.bf16.mxu0 0
  %81 = vmatpush1.bf16.msra.mxu0 0
  %82 = vmatprep.subr.bf16.mxu0 0
  %83 = vmatpush1.bf16.msra.mxu0 0
  %84 = vmatprep.subr.bf16.mxu0 0
  %85 = vmatpush1.bf16.msra.mxu0 0
  %86 = vmatprep.subr.bf16.mxu0 0
  %87 = vmatpush1.bf16.msra.mxu0 0
  %88 = vmatprep.subr.bf16.mxu0 0
  %89 = vmatpush1.bf16.msra.mxu0 0
  %90 = vmatprep.subr.bf16.mxu0 0
  %91 = vmatpush1.bf16.msra.mxu0 0
  %92 = vmatprep.subr.bf16.mxu0 0
  %93 = vmatpush1.bf16.msra.mxu0 0
  %94 = vmatprep.subr.bf16.mxu0 0
  %95 = vmatpush1.bf16.msra.mxu0 0
  %96 = vmatprep.mubr.bf16.mxu0 0
  %97 = vmatmul.mubr.bf16.gmra.mrb[0].mxu0 %v62
  %v98 = vpop.f32.mrb[0].mxu0
  %v99 = vadd.f32 0.0, %v98
  %v100 = vpop.f32.mrb[0].mxu0
  %v101 = vadd.f32 0.0, %v100
  %v102 = vpop.f32.mrb[0].mxu0
  %v103 = vadd.f32 0.0, %v102
  %v104 = vpop.f32.mrb[0].mxu0
  %v105 = vadd.f32 0.0, %v104
  %106 = vdwg.mxu0
  %v107 = vpack.c.bf16 %v103, %v99
  %v108 = vpack.c.bf16 %v105, %v101
  %v109 = vld [vmem:[%s2] sm:$0x3]
  %v112 = vunpack.c.l.s4 1966171168
  %v113 = vunpack.c.0.s8 %v112
  %v114 = vlaneseq
  %v115 = vshrl.u32 %v114, 7
  %v116 = vsub.s32 %v113, %v115
  %v117 = vrot.slane %v109, %v116
  %v118 = vcombine.high %v117, %v117
  %v120 = vunpack.c.l.s4 1966171168
  %v121 = vunpack.c.0.s8 %v120
  %v122 = vlaneseq
  %v123 = vshrl.u32 %v122, 7
  %v124 = vsub.s32 %v121, %v123
  %v125 = vrot.slane %v117, %v124
  %v127 = vunpack.c.l.s4 1966171168
  %v128 = vunpack.c.0.s8 %v127
  %v129 = vlaneseq
  %v130 = vshrl.u32 %v129, 7
  %v131 = vsub.s32 %v128, %v130
  %v132 = vrot.slane %v118, %v131
  %v134 = vpack.i.b16 %v125, %v125
  %v136 = vlaneseq
  %v137 = vshrl.u32 %v136, 7
  %v138 = vsub.s32 0, %v137
  %v139 = vrot.slane %v134, %v138
  %v141 = vpack.i.b16 %v132, %v132
  %v143 = vlaneseq
  %v144 = vshrl.u32 %v143, 7
  %v145 = vsub.s32 0, %v144
  %v146 = vrot.slane %v141, %v145
  %v147 = vadd.bf16 %v107, %v139
  %v148 = vadd.bf16 %v108, %v146
  %v149 = vmax.bf16 %v147, 0
  %v150 = vmax.bf16 %v148, 0
  %v151 = vld [vmem:[%s3] sm:$0xff]
  %v152 = vld [vmem:[%s3 + $0x8] sm:$0xff]
  %v153 = vld [vmem:[%s3 + $0x10] sm:$0xff]
  %v154 = vld [vmem:[%s3 + $0x18] sm:$0xff]
  %v155 = vld [vmem:[%s3 + $0x20] sm:$0xff]
  %v156 = vld [vmem:[%s3 + $0x28] sm:$0xff]
  %v157 = vld [vmem:[%s3 + $0x30] sm:$0xff]
  %v158 = vld [vmem:[%s3 + $0x38] sm:$0xff]
  %v159 = vld [vmem:[%s3 + $0x40] sm:$0xff]
  %v160 = vld [vmem:[%s3 + $0x48] sm:$0xff]
  %v161 = vld [vmem:[%s3 + $0x50] sm:$0xff]
  %v162 = vld [vmem:[%s3 + $0x58] sm:$0xff]
  %v163 = vld [vmem:[%s3 + $0x60] sm:$0xff]
  %v164 = vld [vmem:[%s3 + $0x68] sm:$0xff]
  %v165 = vld [vmem:[%s3 + $0x70] sm:$0xff]
  %v166 = vld [vmem:[%s3 + $0x78] sm:$0xff]
  %v167 = vld [vmem:[%s3 + $0x80] sm:$0xff]
  %v168 = vld [vmem:[%s3 + $0x88] sm:$0xff]
  %v169 = vld [vmem:[%s3 + $0x90] sm:$0xff]
  %v170 = vld [vmem:[%s3 + $0x98] sm:$0xff]
  %v171 = vld [vmem:[%s3 + $0xa0] sm:$0xff]
  %v172 = vld [vmem:[%s3 + $0xa8] sm:$0xff]
  %v173 = vld [vmem:[%s3 + $0xb0] sm:$0xff]
  %v174 = vld [vmem:[%s3 + $0xb8] sm:$0xff]
  %v175 = vld [vmem:[%s3 + $0xc0] sm:$0xff]
  %v176 = vld [vmem:[%s3 + $0xc8] sm:$0xff]
  %v177 = vld [vmem:[%s3 + $0xd0] sm:$0xff]
  %v178 = vld [vmem:[%s3 + $0xd8] sm:$0xff]
  %v179 = vld [vmem:[%s3 + $0xe0] sm:$0xff]
  %v180 = vld [vmem:[%s3 + $0xe8] sm:$0xff]
  %v181 = vld [vmem:[%s3 + $0xf0] sm:$0xff]
  %v182 = vld [vmem:[%s3 + $0xf8] sm:$0xff]
  %v183 = vld [vmem:[%s3 + $0x100] sm:$0xff]
  %v184 = vld [vmem:[%s3 + $0x108] sm:$0xff]
  %v185 = vld [vmem:[%s3 + $0x110] sm:$0xff]
  %v186 = vld [vmem:[%s3 + $0x118] sm:$0xff]
  %v187 = vld [vmem:[%s3 + $0x120] sm:$0xff]
  %v188 = vld [vmem:[%s3 + $0x128] sm:$0xff]
  %v189 = vld [vmem:[%s3 + $0x130] sm:$0xff]
  %v190 = vld [vmem:[%s3 + $0x138] sm:$0xff]
  %v191 = vld [vmem:[%s3 + $0x140] sm:$0xff]
  %v192 = vld [vmem:[%s3 + $0x148] sm:$0xff]
  %v193 = vld [vmem:[%s3 + $0x150] sm:$0xff]
  %v194 = vld [vmem:[%s3 + $0x158] sm:$0xff]
  %v195 = vld [vmem:[%s3 + $0x160] sm:$0xff]
  %v196 = vld [vmem:[%s3 + $0x168] sm:$0xff]
  %v197 = vld [vmem:[%s3 + $0x170] sm:$0xff]
  %v198 = vld [vmem:[%s3 + $0x178] sm:$0xff]
  %v199 = vld [vmem:[%s3 + $0x180] sm:$0xff]
  %v200 = vld [vmem:[%s3 + $0x188] sm:$0xff]
  %v201 = vld [vmem:[%s3 + $0x190] sm:$0xff]
  %v202 = vld [vmem:[%s3 + $0x198] sm:$0xff]
  %v203 = vld [vmem:[%s3 + $0x1a0] sm:$0xff]
  %v204 = vld [vmem:[%s3 + $0x1a8] sm:$0xff]
  %v205 = vld [vmem:[%s3 + $0x1b0] sm:$0xff]
  %v206 = vld [vmem:[%s3 + $0x1b8] sm:$0xff]
  %v207 = vld [vmem:[%s3 + $0x1c0] sm:$0xff]
  %v208 = vld [vmem:[%s3 + $0x1c8] sm:$0xff]
  %v209 = vld [vmem:[%s3 + $0x1d0] sm:$0xff]
  %v210 = vld [vmem:[%s3 + $0x1d8] sm:$0xff]
  %v211 = vld [vmem:[%s3 + $0x1e0] sm:$0xff]
  %v212 = vld [vmem:[%s3 + $0x1e8] sm:$0xff]
  %v213 = vld [vmem:[%s3 + $0x1f0] sm:$0xff]
  %v214 = vld [vmem:[%s3 + $0x1f8] sm:$0xff]
  %v279 = vunpack.c.l.b16 %v151
  %v280 = vunpack.c.h.b16 %v151
  %v281 = vunpack.c.l.b16 %v152
  %v282 = vunpack.c.h.b16 %v152
  %v283 = vunpack.c.l.b16 %v153
  %v284 = vunpack.c.h.b16 %v153
  %v285 = vunpack.c.l.b16 %v154
  %v286 = vunpack.c.h.b16 %v154
  %v287 = vunpack.c.l.b16 %v155
  %v288 = vunpack.c.h.b16 %v155
  %v289 = vunpack.c.l.b16 %v156
  %v290 = vunpack.c.h.b16 %v156
  %v291 = vunpack.c.l.b16 %v157
  %v292 = vunpack.c.h.b16 %v157
  %v293 = vunpack.c.l.b16 %v158
  %v294 = vunpack.c.h.b16 %v158
  %v295 = vunpack.c.l.b16 %v159
  %v296 = vunpack.c.h.b16 %v159
  %v297 = vunpack.c.l.b16 %v160
  %v298 = vunpack.c.h.b16 %v160
  %v299 = vunpack.c.l.b16 %v161
  %v300 = vunpack.c.h.b16 %v161
  %v301 = vunpack.c.l.b16 %v162
  %v302 = vunpack.c.h.b16 %v162
  %v303 = vunpack.c.l.b16 %v163
  %v304 = vunpack.c.h.b16 %v163
  %v305 = vunpack.c.l.b16 %v164
  %v306 = vunpack.c.h.b16 %v164
  %v307 = vunpack.c.l.b16 %v165
  %v308 = vunpack.c.h.b16 %v165
  %v309 = vunpack.c.l.b16 %v166
  %v310 = vunpack.c.h.b16 %v166
  %v311 = vunpack.c.l.b16 %v167
  %v312 = vunpack.c.h.b16 %v167
  %v313 = vunpack.c.l.b16 %v168
  %v314 = vunpack.c.h.b16 %v168
  %v315 = vunpack.c.l.b16 %v169
  %v316 = vunpack.c.h.b16 %v169
  %v317 = vunpack.c.l.b16 %v170
  %v318 = vunpack.c.h.b16 %v170
  %v319 = vunpack.c.l.b16 %v171
  %v320 = vunpack.c.h.b16 %v171
  %v321 = vunpack.c.l.b16 %v172
  %v322 = vunpack.c.h.b16 %v172
  %v323 = vunpack.c.l.b16 %v173
  %v324 = vunpack.c.h.b16 %v173
  %v325 = vunpack.c.l.b16 %v174
  %v326 = vunpack.c.h.b16 %v174
  %v327 = vunpack.c.l.b16 %v175
  %v328 = vunpack.c.h.b16 %v175
  %v329 = vunpack.c.l.b16 %v176
  %v330 = vunpack.c.h.b16 %v176
  %v331 = vunpack.c.l.b16 %v177
  %v332 = vunpack.c.h.b16 %v177
  %v333 = vunpack.c.l.b16 %v178
  %v334 = vunpack.c.h.b16 %v178
  %v335 = vunpack.c.l.b16 %v179
  %v336 = vunpack.c.h.b16 %v179
  %v337 = vunpack.c.l.b16 %v180
  %v338 = vunpack.c.h.b16 %v180
  %v339 = vunpack.c.l.b16 %v181
  %v340 = vunpack.c.h.b16 %v181
  %v341 = vunpack.c.l.b16 %v182
  %v342 = vunpack.c.h.b16 %v182
  %v343 = vunpack.c.l.b16 %v183
  %v344 = vunpack.c.h.b16 %v183
  %v345 = vunpack.c.l.b16 %v184
  %v346 = vunpack.c.h.b16 %v184
  %v347 = vunpack.c.l.b16 %v185
  %v348 = vunpack.c.h.b16 %v185
  %v349 = vunpack.c.l.b16 %v186
  %v350 = vunpack.c.h.b16 %v186
  %v351 = vunpack.c.l.b16 %v187
  %v352 = vunpack.c.h.b16 %v187
  %v353 = vunpack.c.l.b16 %v188
  %v354 = vunpack.c.h.b16 %v188
  %v355 = vunpack.c.l.b16 %v189
  %v356 = vunpack.c.h.b16 %v189
  %v357 = vunpack.c.l.b16 %v190
  %v358 = vunpack.c.h.b16 %v190
  %v359 = vunpack.c.l.b16 %v191
  %v360 = vunpack.c.h.b16 %v191
  %v361 = vunpack.c.l.b16 %v192
  %v362 = vunpack.c.h.b16 %v192
  %v363 = vunpack.c.l.b16 %v193
  %v364 = vunpack.c.h.b16 %v193
  %v365 = vunpack.c.l.b16 %v194
  %v366 = vunpack.c.h.b16 %v194
  %v367 = vunpack.c.l.b16 %v195
  %v368 = vunpack.c.h.b16 %v195
  %v369 = vunpack.c.l.b16 %v196
  %v370 = vunpack.c.h.b16 %v196
  %v371 = vunpack.c.l.b16 %v197
  %v372 = vunpack.c.h.b16 %v197
  %v373 = vunpack.c.l.b16 %v198
  %v374 = vunpack.c.h.b16 %v198
  %v375 = vunpack.c.l.b16 %v199
  %v376 = vunpack.c.h.b16 %v199
  %v377 = vunpack.c.l.b16 %v200
  %v378 = vunpack.c.h.b16 %v200
  %v379 = vunpack.c.l.b16 %v201
  %v380 = vunpack.c.h.b16 %v201
  %v381 = vunpack.c.l.b16 %v202
  %v382 = vunpack.c.h.b16 %v202
  %v383 = vunpack.c.l.b16 %v203
  %v384 = vunpack.c.h.b16 %v203
  %v385 = vunpack.c.l.b16 %v204
  %v386 = vunpack.c.h.b16 %v204
  %v387 = vunpack.c.l.b16 %v205
  %v388 = vunpack.c.h.b16 %v205
  %v389 = vunpack.c.l.b16 %v206
  %v390 = vunpack.c.h.b16 %v206
  %v391 = vunpack.c.l.b16 %v207
  %v392 = vunpack.c.h.b16 %v207
  %v393 = vunpack.c.l.b16 %v208
  %v394 = vunpack.c.h.b16 %v208
  %v395 = vunpack.c.l.b16 %v209
  %v396 = vunpack.c.h.b16 %v209
  %v397 = vunpack.c.l.b16 %v210
  %v398 = vunpack.c.h.b16 %v210
  %v399 = vunpack.c.l.b16 %v211
  %v400 = vunpack.c.h.b16 %v211
  %v401 = vunpack.c.l.b16 %v212
  %v402 = vunpack.c.h.b16 %v212
  %v403 = vunpack.c.l.b16 %v213
  %v404 = vunpack.c.h.b16 %v213
  %v405 = vunpack.c.l.b16 %v214
  %v406 = vunpack.c.h.b16 %v214
  %v407 = vpack.c.b16 %v283, %v279
  %v408 = vpack.c.b16 %v284, %v280
  %v409 = vpack.c.b16 %v285, %v281
  %v410 = vpack.c.b16 %v286, %v282
  %v411 = vpack.c.b16 %v291, %v287
  %v412 = vpack.c.b16 %v292, %v288
  %v413 = vpack.c.b16 %v293, %v289
  %v414 = vpack.c.b16 %v294, %v290
  %v415 = vpack.c.b16 %v299, %v295
  %v416 = vpack.c.b16 %v300, %v296
  %v417 = vpack.c.b16 %v301, %v297
  %v418 = vpack.c.b16 %v302, %v298
  %v419 = vpack.c.b16 %v307, %v303
  %v420 = vpack.c.b16 %v308, %v304
  %v421 = vpack.c.b16 %v309, %v305
  %v422 = vpack.c.b16 %v310, %v306
  %v423 = vpack.c.b16 %v315, %v311
  %v424 = vpack.c.b16 %v316, %v312
  %v425 = vpack.c.b16 %v317, %v313
  %v426 = vpack.c.b16 %v318, %v314
  %v427 = vpack.c.b16 %v323, %v319
  %v428 = vpack.c.b16 %v324, %v320
  %v429 = vpack.c.b16 %v325, %v321
  %v430 = vpack.c.b16 %v326, %v322
  %v431 = vpack.c.b16 %v331, %v327
  %v432 = vpack.c.b16 %v332, %v328
  %v433 = vpack.c.b16 %v333, %v329
  %v434 = vpack.c.b16 %v334, %v330
  %v435 = vpack.c.b16 %v339, %v335
  %v436 = vpack.c.b16 %v340, %v336
  %v437 = vpack.c.b16 %v341, %v337
  %v438 = vpack.c.b16 %v342, %v338
  %v439 = vpack.c.b16 %v347, %v343
  %v440 = vpack.c.b16 %v348, %v344
  %v441 = vpack.c.b16 %v349, %v345
  %v442 = vpack.c.b16 %v350, %v346
  %v443 = vpack.c.b16 %v355, %v351
  %v444 = vpack.c.b16 %v356, %v352
  %v445 = vpack.c.b16 %v357, %v353
  %v446 = vpack.c.b16 %v358, %v354
  %v447 = vpack.c.b16 %v363, %v359
  %v448 = vpack.c.b16 %v364, %v360
  %v449 = vpack.c.b16 %v365, %v361
  %v450 = vpack.c.b16 %v366, %v362
  %v451 = vpack.c.b16 %v371, %v367
  %v452 = vpack.c.b16 %v372, %v368
  %v453 = vpack.c.b16 %v373, %v369
  %v454 = vpack.c.b16 %v374, %v370
  %v455 = vpack.c.b16 %v379, %v375
  %v456 = vpack.c.b16 %v380, %v376
  %v457 = vpack.c.b16 %v381, %v377
  %v458 = vpack.c.b16 %v382, %v378
  %v459 = vpack.c.b16 %v387, %v383
  %v460 = vpack.c.b16 %v388, %v384
  %v461 = vpack.c.b16 %v389, %v385
  %v462 = vpack.c.b16 %v390, %v386
  %v463 = vpack.c.b16 %v395, %v391
  %v464 = vpack.c.b16 %v396, %v392
  %v465 = vpack.c.b16 %v397, %v393
  %v466 = vpack.c.b16 %v398, %v394
  %v467 = vpack.c.b16 %v403, %v399
  %v468 = vpack.c.b16 %v404, %v400
  %v469 = vpack.c.b16 %v405, %v401
  %v470 = vpack.c.b16 %v406, %v402
  %535 = vmatprep.subr.bf16.mxu0 %v408
  %536 = vmatpush1.bf16.msra.mxu0 %v407
  %537 = vmatprep.subr.bf16.mxu0 %v412
  %538 = vmatpush1.bf16.msra.mxu0 %v411
  %539 = vmatprep.subr.bf16.mxu0 %v416
  %540 = vmatpush1.bf16.msra.mxu0 %v415
  %541 = vmatprep.subr.bf16.mxu0 %v420
  %542 = vmatpush1.bf16.msra.mxu0 %v419
  %543 = vmatprep.subr.bf16.mxu0 %v424
  %544 = vmatpush1.bf16.msra.mxu0 %v423
  %545 = vmatprep.subr.bf16.mxu0 %v428
  %546 = vmatpush1.bf16.msra.mxu0 %v427
  %547 = vmatprep.subr.bf16.mxu0 %v432
  %548 = vmatpush1.bf16.msra.mxu0 %v431
  %549 = vmatprep.subr.bf16.mxu0 %v436
  %550 = vmatpush1.bf16.msra.mxu0 %v435
  %551 = vmatprep.subr.bf16.mxu0 %v440
  %552 = vmatpush1.bf16.msra.mxu0 %v439
  %553 = vmatprep.subr.bf16.mxu0 %v444
  %554 = vmatpush1.bf16.msra.mxu0 %v443
  %555 = vmatprep.subr.bf16.mxu0 %v448
  %556 = vmatpush1.bf16.msra.mxu0 %v447
  %557 = vmatprep.subr.bf16.mxu0 %v452
  %558 = vmatpush1.bf16.msra.mxu0 %v451
  %559 = vmatprep.subr.bf16.mxu0 %v456
  %560 = vmatpush1.bf16.msra.mxu0 %v455
  %561 = vmatprep.subr.bf16.mxu0 %v460
  %562 = vmatpush1.bf16.msra.mxu0 %v459
  %563 = vmatprep.subr.bf16.mxu0 %v464
  %564 = vmatpush1.bf16.msra.mxu0 %v463
  %565 = vmatprep.subr.bf16.mxu0 %v468
  %566 = vmatpush1.bf16.msra.mxu0 %v467
  %567 = vmatprep.mubr.bf16.mxu0 %v150
  %568 = vmatmul.mubr.bf16.gmra.mrb[0].mxu0 %v149
  %v569 = vpop.f32.mrb[0].mxu0
  %v570 = vadd.f32 0.0, %v569
  %v571 = vpop.f32.mrb[0].mxu0
  %v572 = vadd.f32 0.0, %v571
  %v573 = vpop.f32.mrb[0].mxu0
  %v574 = vadd.f32 0.0, %v573
  %v575 = vpop.f32.mrb[0].mxu0
  %v576 = vadd.f32 0.0, %v575
  %577 = vdwg.mxu0
  %578 = vmatprep.subr.bf16.mxu0 %v410
  %579 = vmatpush1.bf16.msra.mxu0 %v409
  %580 = vmatprep.subr.bf16.mxu0 %v414
  %581 = vmatpush1.bf16.msra.mxu0 %v413
  %582 = vmatprep.subr.bf16.mxu0 %v418
  %583 = vmatpush1.bf16.msra.mxu0 %v417
  %584 = vmatprep.subr.bf16.mxu0 %v422
  %585 = vmatpush1.bf16.msra.mxu0 %v421
  %586 = vmatprep.subr.bf16.mxu0 %v426
  %587 = vmatpush1.bf16.msra.mxu0 %v425
  %588 = vmatprep.subr.bf16.mxu0 %v430
  %589 = vmatpush1.bf16.msra.mxu0 %v429
  %590 = vmatprep.subr.bf16.mxu0 %v434
  %591 = vmatpush1.bf16.msra.mxu0 %v433
  %592 = vmatprep.subr.bf16.mxu0 %v438
  %593 = vmatpush1.bf16.msra.mxu0 %v437
  %594 = vmatprep.subr.bf16.mxu0 %v442
  %595 = vmatpush1.bf16.msra.mxu0 %v441
  %596 = vmatprep.subr.bf16.mxu0 %v446
  %597 = vmatpush1.bf16.msra.mxu0 %v445
  %598 = vmatprep.subr.bf16.mxu0 %v450
  %599 = vmatpush1.bf16.msra.mxu0 %v449
  %600 = vmatprep.subr.bf16.mxu0 %v454
  %601 = vmatpush1.bf16.msra.mxu0 %v453
  %602 = vmatprep.subr.bf16.mxu0 %v458
  %603 = vmatpush1.bf16.msra.mxu0 %v457
  %604 = vmatprep.subr.bf16.mxu0 %v462
  %605 = vmatpush1.bf16.msra.mxu0 %v461
  %606 = vmatprep.subr.bf16.mxu0 %v466
  %607 = vmatpush1.bf16.msra.mxu0 %v465
  %608 = vmatprep.subr.bf16.mxu0 %v470
  %609 = vmatpush1.bf16.msra.mxu0 %v469
  %610 = vmatprep.mubr.bf16.mxu0 %v150
  %611 = vmatmul.mubr.bf16.gmra.mrb[0].mxu0 %v149
  %v612 = vpop.f32.mrb[0].mxu0
  %v613 = vadd.f32 0.0, %v612
  %v614 = vpop.f32.mrb[0].mxu0
  %v615 = vadd.f32 0.0, %v614
  %v616 = vpop.f32.mrb[0].mxu0
  %v617 = vadd.f32 0.0, %v616
  %v618 = vpop.f32.mrb[0].mxu0
  %v619 = vadd.f32 0.0, %v618
  %620 = vdwg.mxu0
  %v621 = vpack.c.bf16 %v574, %v570
  %v622 = vpack.c.bf16 %v576, %v572
  %v623 = vpack.c.bf16 %v617, %v613
  %v624 = vpack.c.bf16 %v619, %v615
  %v625 = vld [vmem:[%s4] sm:$0xf]
  %v628 = vunpack.c.l.s4 1966171168
  %v629 = vunpack.c.0.s8 %v628
  %v630 = vlaneseq
  %v631 = vshrl.u32 %v630, 7
  %v632 = vsub.s32 %v629, %v631
  %v633 = vrot.slane %v625, %v632
  %v634 = vcombine.high %v633, %v633
  %v636 = vunpack.c.l.s4 1966171168
  %v637 = vunpack.c.0.s8 %v636
  %v638 = vlaneseq
  %v639 = vshrl.u32 %v638, 7
  %v640 = vsub.s32 %v637, %v639
  %v641 = vrot.slane %v633, %v640
  %v643 = vunpack.c.l.s4 1966171168
  %v644 = vunpack.c.0.s8 %v643
  %v645 = vlaneseq
  %v646 = vshrl.u32 %v645, 7
  %v647 = vsub.s32 %v644, %v646
  %v648 = vrot.slane %v634, %v647
  %v649 = vcombine.high %v641, %v641
  %v650 = vcombine.high %v648, %v648
  %v652 = vpack.i.b16 %v641, %v641
  %v654 = vlaneseq
  %v655 = vshrl.u32 %v654, 7
  %v656 = vsub.s32 0, %v655
  %v657 = vrot.slane %v652, %v656
  %v659 = vpack.i.b16 %v648, %v648
  %v661 = vlaneseq
  %v662 = vshrl.u32 %v661, 7
  %v663 = vsub.s32 0, %v662
  %v664 = vrot.slane %v659, %v663
  %v666 = vpack.i.b16 %v649, %v649
  %v668 = vlaneseq
  %v669 = vshrl.u32 %v668, 7
  %v670 = vsub.s32 0, %v669
  %v671 = vrot.slane %v666, %v670
  %v673 = vpack.i.b16 %v650, %v650
  %v675 = vlaneseq
  %v676 = vshrl.u32 %v675, 7
  %v677 = vsub.s32 0, %v676
  %v678 = vrot.slane %v673, %v677
  %v679 = vadd.bf16 %v621, %v657
  %v680 = vadd.bf16 %v622, %v664
  %v681 = vadd.bf16 %v623, %v671
  %v682 = vadd.bf16 %v624, %v678
  %v683 = vmax.bf16 %v679, 0
  %v684 = vmax.bf16 %v680, 0
  %v685 = vmax.bf16 %v681, 0
  %v686 = vmax.bf16 %v682, 0
  %v687 = vld [vmem:[%s5] sm:$0xff]
  %v688 = vld [vmem:[%s5 + $0x8] sm:$0xff]
  %v689 = vld [vmem:[%s5 + $0x10] sm:$0xff]
  %v690 = vld [vmem:[%s5 + $0x18] sm:$0xff]
  %v691 = vld [vmem:[%s5 + $0x20] sm:$0xff]
  %v692 = vld [vmem:[%s5 + $0x28] sm:$0xff]
  %v693 = vld [vmem:[%s5 + $0x30] sm:$0xff]
  %v694 = vld [vmem:[%s5 + $0x38] sm:$0xff]
  %v695 = vld [vmem:[%s5 + $0x40] sm:$0xff]
  %v696 = vld [vmem:[%s5 + $0x48] sm:$0xff]
  %v697 = vld [vmem:[%s5 + $0x50] sm:$0xff]
  %v698 = vld [vmem:[%s5 + $0x58] sm:$0xff]
  %v699 = vld [vmem:[%s5 + $0x60] sm:$0xff]
  %v700 = vld [vmem:[%s5 + $0x68] sm:$0xff]
  %v701 = vld [vmem:[%s5 + $0x70] sm:$0xff]
  %v702 = vld [vmem:[%s5 + $0x78] sm:$0xff]
  %v703 = vld [vmem:[%s5 + $0x80] sm:$0xff]
  %v704 = vld [vmem:[%s5 + $0x88] sm:$0xff]
  %v705 = vld [vmem:[%s5 + $0x90] sm:$0xff]
  %v706 = vld [vmem:[%s5 + $0x98] sm:$0xff]
  %v707 = vld [vmem:[%s5 + $0xa0] sm:$0xff]
  %v708 = vld [vmem:[%s5 + $0xa8] sm:$0xff]
  %v709 = vld [vmem:[%s5 + $0xb0] sm:$0xff]
  %v710 = vld [vmem:[%s5 + $0xb8] sm:$0xff]
  %v711 = vld [vmem:[%s5 + $0xc0] sm:$0xff]
  %v712 = vld [vmem:[%s5 + $0xc8] sm:$0xff]
  %v713 = vld [vmem:[%s5 + $0xd0] sm:$0xff]
  %v714 = vld [vmem:[%s5 + $0xd8] sm:$0xff]
  %v715 = vld [vmem:[%s5 + $0xe0] sm:$0xff]
  %v716 = vld [vmem:[%s5 + $0xe8] sm:$0xff]
  %v717 = vld [vmem:[%s5 + $0xf0] sm:$0xff]
  %v718 = vld [vmem:[%s5 + $0xf8] sm:$0xff]
  %v719 = vld [vmem:[%s5 + $0x100] sm:$0xff]
  %v720 = vld [vmem:[%s5 + $0x108] sm:$0xff]
  %v721 = vld [vmem:[%s5 + $0x110] sm:$0xff]
  %v722 = vld [vmem:[%s5 + $0x118] sm:$0xff]
  %v723 = vld [vmem:[%s5 + $0x120] sm:$0xff]
  %v724 = vld [vmem:[%s5 + $0x128] sm:$0xff]
  %v725 = vld [vmem:[%s5 + $0x130] sm:$0xff]
  %v726 = vld [vmem:[%s5 + $0x138] sm:$0xff]
  %v727 = vld [vmem:[%s5 + $0x140] sm:$0xff]
  %v728 = vld [vmem:[%s5 + $0x148] sm:$0xff]
  %v729 = vld [vmem:[%s5 + $0x150] sm:$0xff]
  %v730 = vld [vmem:[%s5 + $0x158] sm:$0xff]
  %v731 = vld [vmem:[%s5 + $0x160] sm:$0xff]
  %v732 = vld [vmem:[%s5 + $0x168] sm:$0xff]
  %v733 = vld [vmem:[%s5 + $0x170] sm:$0xff]
  %v734 = vld [vmem:[%s5 + $0x178] sm:$0xff]
  %v735 = vld [vmem:[%s5 + $0x180] sm:$0xff]
  %v736 = vld [vmem:[%s5 + $0x188] sm:$0xff]
  %v737 = vld [vmem:[%s5 + $0x190] sm:$0xff]
  %v738 = vld [vmem:[%s5 + $0x198] sm:$0xff]
  %v739 = vld [vmem:[%s5 + $0x1a0] sm:$0xff]
  %v740 = vld [vmem:[%s5 + $0x1a8] sm:$0xff]
  %v741 = vld [vmem:[%s5 + $0x1b0] sm:$0xff]
  %v742 = vld [vmem:[%s5 + $0x1b8] sm:$0xff]
  %v743 = vld [vmem:[%s5 + $0x1c0] sm:$0xff]
  %v744 = vld [vmem:[%s5 + $0x1c8] sm:$0xff]
  %v745 = vld [vmem:[%s5 + $0x1d0] sm:$0xff]
  %v746 = vld [vmem:[%s5 + $0x1d8] sm:$0xff]
  %v747 = vld [vmem:[%s5 + $0x1e0] sm:$0xff]
  %v748 = vld [vmem:[%s5 + $0x1e8] sm:$0xff]
  %v749 = vld [vmem:[%s5 + $0x1f0] sm:$0xff]
  %v750 = vld [vmem:[%s5 + $0x1f8] sm:$0xff]
  %v751 = vld [vmem:[%s5 + $0x200] sm:$0xff]
  %v752 = vld [vmem:[%s5 + $0x208] sm:$0xff]
  %v753 = vld [vmem:[%s5 + $0x210] sm:$0xff]
  %v754 = vld [vmem:[%s5 + $0x218] sm:$0xff]
  %v755 = vld [vmem:[%s5 + $0x220] sm:$0xff]
  %v756 = vld [vmem:[%s5 + $0x228] sm:$0xff]
  %v757 = vld [vmem:[%s5 + $0x230] sm:$0xff]
  %v758 = vld [vmem:[%s5 + $0x238] sm:$0xff]
  %v759 = vld [vmem:[%s5 + $0x240] sm:$0xff]
  %v760 = vld [vmem:[%s5 + $0x248] sm:$0xff]
  %v761 = vld [vmem:[%s5 + $0x250] sm:$0xff]
  %v762 = vld [vmem:[%s5 + $0x258] sm:$0xff]
  %v763 = vld [vmem:[%s5 + $0x260] sm:$0xff]
  %v764 = vld [vmem:[%s5 + $0x268] sm:$0xff]
  %v765 = vld [vmem:[%s5 + $0x270] sm:$0xff]
  %v766 = vld [vmem:[%s5 + $0x278] sm:$0xff]
  %v767 = vld [vmem:[%s5 + $0x280] sm:$0xff]
  %v768 = vld [vmem:[%s5 + $0x288] sm:$0xff]
  %v769 = vld [vmem:[%s5 + $0x290] sm:$0xff]
  %v770 = vld [vmem:[%s5 + $0x298] sm:$0xff]
  %v771 = vld [vmem:[%s5 + $0x2a0] sm:$0xff]
  %v772 = vld [vmem:[%s5 + $0x2a8] sm:$0xff]
  %v773 = vld [vmem:[%s5 + $0x2b0] sm:$0xff]
  %v774 = vld [vmem:[%s5 + $0x2b8] sm:$0xff]
  %v775 = vld [vmem:[%s5 + $0x2c0] sm:$0xff]
  %v776 = vld [vmem:[%s5 + $0x2c8] sm:$0xff]
  %v777 = vld [vmem:[%s5 + $0x2d0] sm:$0xff]
  %v778 = vld [vmem:[%s5 + $0x2d8] sm:$0xff]
  %v779 = vld [vmem:[%s5 + $0x2e0] sm:$0xff]
  %v780 = vld [vmem:[%s5 + $0x2e8] sm:$0xff]
  %v781 = vld [vmem:[%s5 + $0x2f0] sm:$0xff]
  %v782 = vld [vmem:[%s5 + $0x2f8] sm:$0xff]
  %v783 = vld [vmem:[%s5 + $0x300] sm:$0xff]
  %v784 = vld [vmem:[%s5 + $0x308] sm:$0xff]
  %v785 = vld [vmem:[%s5 + $0x310] sm:$0xff]
  %v786 = vld [vmem:[%s5 + $0x318] sm:$0xff]
  %v787 = vld [vmem:[%s5 + $0x320] sm:$0xff]
  %v788 = vld [vmem:[%s5 + $0x328] sm:$0xff]
  %v789 = vld [vmem:[%s5 + $0x330] sm:$0xff]
  %v790 = vld [vmem:[%s5 + $0x338] sm:$0xff]
  %v791 = vld [vmem:[%s5 + $0x340] sm:$0xff]
  %v792 = vld [vmem:[%s5 + $0x348] sm:$0xff]
  %v793 = vld [vmem:[%s5 + $0x350] sm:$0xff]
  %v794 = vld [vmem:[%s5 + $0x358] sm:$0xff]
  %v795 = vld [vmem:[%s5 + $0x360] sm:$0xff]
  %v796 = vld [vmem:[%s5 + $0x368] sm:$0xff]
  %v797 = vld [vmem:[%s5 + $0x370] sm:$0xff]
  %v798 = vld [vmem:[%s5 + $0x378] sm:$0xff]
  %v799 = vld [vmem:[%s5 + $0x380] sm:$0xff]
  %v800 = vld [vmem:[%s5 + $0x388] sm:$0xff]
  %v801 = vld [vmem:[%s5 + $0x390] sm:$0xff]
  %v802 = vld [vmem:[%s5 + $0x398] sm:$0xff]
  %v803 = vld [vmem:[%s5 + $0x3a0] sm:$0xff]
  %v804 = vld [vmem:[%s5 + $0x3a8] sm:$0xff]
  %v805 = vld [vmem:[%s5 + $0x3b0] sm:$0xff]
  %v806 = vld [vmem:[%s5 + $0x3b8] sm:$0xff]
  %v807 = vld [vmem:[%s5 + $0x3c0] sm:$0xff]
  %v808 = vld [vmem:[%s5 + $0x3c8] sm:$0xff]
  %v809 = vld [vmem:[%s5 + $0x3d0] sm:$0xff]
  %v810 = vld [vmem:[%s5 + $0x3d8] sm:$0xff]
  %v811 = vld [vmem:[%s5 + $0x3e0] sm:$0xff]
  %v812 = vld [vmem:[%s5 + $0x3e8] sm:$0xff]
  %v813 = vld [vmem:[%s5 + $0x3f0] sm:$0xff]
  %v814 = vld [vmem:[%s5 + $0x3f8] sm:$0xff]
  %v943 = vunpack.c.l.b16 %v687
  %v944 = vunpack.c.h.b16 %v687
  %v945 = vunpack.c.l.b16 %v688
  %v946 = vunpack.c.h.b16 %v688
  %v947 = vunpack.c.l.b16 %v689
  %v948 = vunpack.c.h.b16 %v689
  %v949 = vunpack.c.l.b16 %v690
  %v950 = vunpack.c.h.b16 %v690
  %v951 = vunpack.c.l.b16 %v691
  %v952 = vunpack.c.h.b16 %v691
  %v953 = vunpack.c.l.b16 %v692
  %v954 = vunpack.c.h.b16 %v692
  %v955 = vunpack.c.l.b16 %v693
  %v956 = vunpack.c.h.b16 %v693
  %v957 = vunpack.c.l.b16 %v694
  %v958 = vunpack.c.h.b16 %v694
  %v959 = vunpack.c.l.b16 %v695
  %v960 = vunpack.c.h.b16 %v695
  %v961 = vunpack.c.l.b16 %v696
  %v962 = vunpack.c.h.b16 %v696
  %v963 = vunpack.c.l.b16 %v697
  %v964 = vunpack.c.h.b16 %v697
  %v965 = vunpack.c.l.b16 %v698
  %v966 = vunpack.c.h.b16 %v698
  %v967 = vunpack.c.l.b16 %v699
  %v968 = vunpack.c.h.b16 %v699
  %v969 = vunpack.c.l.b16 %v700
  %v970 = vunpack.c.h.b16 %v700
  %v971 = vunpack.c.l.b16 %v701
  %v972 = vunpack.c.h.b16 %v701
  %v973 = vunpack.c.l.b16 %v702
  %v974 = vunpack.c.h.b16 %v702
  %v975 = vunpack.c.l.b16 %v703
  %v976 = vunpack.c.h.b16 %v703
  %v977 = vunpack.c.l.b16 %v704
  %v978 = vunpack.c.h.b16 %v704
  %v979 = vunpack.c.l.b16 %v705
  %v980 = vunpack.c.h.b16 %v705
  %v981 = vunpack.c.l.b16 %v706
  %v982 = vunpack.c.h.b16 %v706
  %v983 = vunpack.c.l.b16 %v707
  %v984 = vunpack.c.h.b16 %v707
  %v985 = vunpack.c.l.b16 %v708
  %v986 = vunpack.c.h.b16 %v708
  %v987 = vunpack.c.l.b16 %v709
  %v988 = vunpack.c.h.b16 %v709
  %v989 = vunpack.c.l.b16 %v710
  %v990 = vunpack.c.h.b16 %v710
  %v991 = vunpack.c.l.b16 %v711
  %v992 = vunpack.c.h.b16 %v711
  %v993 = vunpack.c.l.b16 %v712
  %v994 = vunpack.c.h.b16 %v712
  %v995 = vunpack.c.l.b16 %v713
  %v996 = vunpack.c.h.b16 %v713
  %v997 = vunpack.c.l.b16 %v714
  %v998 = vunpack.c.h.b16 %v714
  %v999 = vunpack.c.l.b16 %v715
  %v1000 = vunpack.c.h.b16 %v715
  %v1001 = vunpack.c.l.b16 %v716
  %v1002 = vunpack.c.h.b16 %v716
  %v1003 = vunpack.c.l.b16 %v717
  %v1004 = vunpack.c.h.b16 %v717
  %v1005 = vunpack.c.l.b16 %v718
  %v1006 = vunpack.c.h.b16 %v718
  %v1007 = vunpack.c.l.b16 %v719
  %v1008 = vunpack.c.h.b16 %v719
  %v1009 = vunpack.c.l.b16 %v720
  %v1010 = vunpack.c.h.b16 %v720
  %v1011 = vunpack.c.l.b16 %v721
  %v1012 = vunpack.c.h.b16 %v721
  %v1013 = vunpack.c.l.b16 %v722
  %v1014 = vunpack.c.h.b16 %v722
  %v1015 = vunpack.c.l.b16 %v723
  %v1016 = vunpack.c.h.b16 %v723
  %v1017 = vunpack.c.l.b16 %v724
  %v1018 = vunpack.c.h.b16 %v724
  %v1019 = vunpack.c.l.b16 %v725
  %v1020 = vunpack.c.h.b16 %v725
  %v1021 = vunpack.c.l.b16 %v726
  %v1022 = vunpack.c.h.b16 %v726
  %v1023 = vunpack.c.l.b16 %v727
  %v1024 = vunpack.c.h.b16 %v727
  %v1025 = vunpack.c.l.b16 %v728
  %v1026 = vunpack.c.h.b16 %v728
  %v1027 = vunpack.c.l.b16 %v729
  %v1028 = vunpack.c.h.b16 %v729
  %v1029 = vunpack.c.l.b16 %v730
  %v1030 = vunpack.c.h.b16 %v730
  %v1031 = vunpack.c.l.b16 %v731
  %v1032 = vunpack.c.h.b16 %v731
  %v1033 = vunpack.c.l.b16 %v732
  %v1034 = vunpack.c.h.b16 %v732
  %v1035 = vunpack.c.l.b16 %v733
  %v1036 = vunpack.c.h.b16 %v733
  %v1037 = vunpack.c.l.b16 %v734
  %v1038 = vunpack.c.h.b16 %v734
  %v1039 = vunpack.c.l.b16 %v735
  %v1040 = vunpack.c.h.b16 %v735
  %v1041 = vunpack.c.l.b16 %v736
  %v1042 = vunpack.c.h.b16 %v736
  %v1043 = vunpack.c.l.b16 %v737
  %v1044 = vunpack.c.h.b16 %v737
  %v1045 = vunpack.c.l.b16 %v738
  %v1046 = vunpack.c.h.b16 %v738
  %v1047 = vunpack.c.l.b16 %v739
  %v1048 = vunpack.c.h.b16 %v739
  %v1049 = vunpack.c.l.b16 %v740
  %v1050 = vunpack.c.h.b16 %v740
  %v1051 = vunpack.c.l.b16 %v741
  %v1052 = vunpack.c.h.b16 %v741
  %v1053 = vunpack.c.l.b16 %v742
  %v1054 = vunpack.c.h.b16 %v742
  %v1055 = vunpack.c.l.b16 %v743
  %v1056 = vunpack.c.h.b16 %v743
  %v1057 = vunpack.c.l.b16 %v744
  %v1058 = vunpack.c.h.b16 %v744
  %v1059 = vunpack.c.l.b16 %v745
  %v1060 = vunpack.c.h.b16 %v745
  %v1061 = vunpack.c.l.b16 %v746
  %v1062 = vunpack.c.h.b16 %v746
  %v1063 = vunpack.c.l.b16 %v747
  %v1064 = vunpack.c.h.b16 %v747
  %v1065 = vunpack.c.l.b16 %v748
  %v1066 = vunpack.c.h.b16 %v748
  %v1067 = vunpack.c.l.b16 %v749
  %v1068 = vunpack.c.h.b16 %v749
  %v1069 = vunpack.c.l.b16 %v750
  %v1070 = vunpack.c.h.b16 %v750
  %v1071 = vunpack.c.l.b16 %v751
  %v1072 = vunpack.c.h.b16 %v751
  %v1073 = vunpack.c.l.b16 %v752
  %v1074 = vunpack.c.h.b16 %v752
  %v1075 = vunpack.c.l.b16 %v753
  %v1076 = vunpack.c.h.b16 %v753
  %v1077 = vunpack.c.l.b16 %v754
  %v1078 = vunpack.c.h.b16 %v754
  %v1079 = vunpack.c.l.b16 %v755
  %v1080 = vunpack.c.h.b16 %v755
  %v1081 = vunpack.c.l.b16 %v756
  %v1082 = vunpack.c.h.b16 %v756
  %v1083 = vunpack.c.l.b16 %v757
  %v1084 = vunpack.c.h.b16 %v757
  %v1085 = vunpack.c.l.b16 %v758
  %v1086 = vunpack.c.h.b16 %v758
  %v1087 = vunpack.c.l.b16 %v759
  %v1088 = vunpack.c.h.b16 %v759
  %v1089 = vunpack.c.l.b16 %v760
  %v1090 = vunpack.c.h.b16 %v760
  %v1091 = vunpack.c.l.b16 %v761
  %v1092 = vunpack.c.h.b16 %v761
  %v1093 = vunpack.c.l.b16 %v762
  %v1094 = vunpack.c.h.b16 %v762
  %v1095 = vunpack.c.l.b16 %v763
  %v1096 = vunpack.c.h.b16 %v763
  %v1097 = vunpack.c.l.b16 %v764
  %v1098 = vunpack.c.h.b16 %v764
  %v1099 = vunpack.c.l.b16 %v765
  %v1100 = vunpack.c.h.b16 %v765
  %v1101 = vunpack.c.l.b16 %v766
  %v1102 = vunpack.c.h.b16 %v766
  %v1103 = vunpack.c.l.b16 %v767
  %v1104 = vunpack.c.h.b16 %v767
  %v1105 = vunpack.c.l.b16 %v768
  %v1106 = vunpack.c.h.b16 %v768
  %v1107 = vunpack.c.l.b16 %v769
  %v1108 = vunpack.c.h.b16 %v769
  %v1109 = vunpack.c.l.b16 %v770
  %v1110 = vunpack.c.h.b16 %v770
  %v1111 = vunpack.c.l.b16 %v771
  %v1112 = vunpack.c.h.b16 %v771
  %v1113 = vunpack.c.l.b16 %v772
  %v1114 = vunpack.c.h.b16 %v772
  %v1115 = vunpack.c.l.b16 %v773
  %v1116 = vunpack.c.h.b16 %v773
  %v1117 = vunpack.c.l.b16 %v774
  %v1118 = vunpack.c.h.b16 %v774
  %v1119 = vunpack.c.l.b16 %v775
  %v1120 = vunpack.c.h.b16 %v775
  %v1121 = vunpack.c.l.b16 %v776
  %v1122 = vunpack.c.h.b16 %v776
  %v1123 = vunpack.c.l.b16 %v777
  %v1124 = vunpack.c.h.b16 %v777
  %v1125 = vunpack.c.l.b16 %v778
  %v1126 = vunpack.c.h.b16 %v778
  %v1127 = vunpack.c.l.b16 %v779
  %v1128 = vunpack.c.h.b16 %v779
  %v1129 = vunpack.c.l.b16 %v780
  %v1130 = vunpack.c.h.b16 %v780
  %v1131 = vunpack.c.l.b16 %v781
  %v1132 = vunpack.c.h.b16 %v781
  %v1133 = vunpack.c.l.b16 %v782
  %v1134 = vunpack.c.h.b16 %v782
  %v1135 = vunpack.c.l.b16 %v783
  %v1136 = vunpack.c.h.b16 %v783
  %v1137 = vunpack.c.l.b16 %v784
  %v1138 = vunpack.c.h.b16 %v784
  %v1139 = vunpack.c.l.b16 %v785
  %v1140 = vunpack.c.h.b16 %v785
  %v1141 = vunpack.c.l.b16 %v786
  %v1142 = vunpack.c.h.b16 %v786
  %v1143 = vunpack.c.l.b16 %v787
  %v1144 = vunpack.c.h.b16 %v787
  %v1145 = vunpack.c.l.b16 %v788
  %v1146 = vunpack.c.h.b16 %v788
  %v1147 = vunpack.c.l.b16 %v789
  %v1148 = vunpack.c.h.b16 %v789
  %v1149 = vunpack.c.l.b16 %v790
  %v1150 = vunpack.c.h.b16 %v790
  %v1151 = vunpack.c.l.b16 %v791
  %v1152 = vunpack.c.h.b16 %v791
  %v1153 = vunpack.c.l.b16 %v792
  %v1154 = vunpack.c.h.b16 %v792
  %v1155 = vunpack.c.l.b16 %v793
  %v1156 = vunpack.c.h.b16 %v793
  %v1157 = vunpack.c.l.b16 %v794
  %v1158 = vunpack.c.h.b16 %v794
  %v1159 = vunpack.c.l.b16 %v795
  %v1160 = vunpack.c.h.b16 %v795
  %v1161 = vunpack.c.l.b16 %v796
  %v1162 = vunpack.c.h.b16 %v796
  %v1163 = vunpack.c.l.b16 %v797
  %v1164 = vunpack.c.h.b16 %v797
  %v1165 = vunpack.c.l.b16 %v798
  %v1166 = vunpack.c.h.b16 %v798
  %v1167 = vunpack.c.l.b16 %v799
  %v1168 = vunpack.c.h.b16 %v799
  %v1169 = vunpack.c.l.b16 %v800
  %v1170 = vunpack.c.h.b16 %v800
  %v1171 = vunpack.c.l.b16 %v801
  %v1172 = vunpack.c.h.b16 %v801
  %v1173 = vunpack.c.l.b16 %v802
  %v1174 = vunpack.c.h.b16 %v802
  %v1175 = vunpack.c.l.b16 %v803
  %v1176 = vunpack.c.h.b16 %v803
  %v1177 = vunpack.c.l.b16 %v804
  %v1178 = vunpack.c.h.b16 %v804
  %v1179 = vunpack.c.l.b16 %v805
  %v1180 = vunpack.c.h.b16 %v805
  %v1181 = vunpack.c.l.b16 %v806
  %v1182 = vunpack.c.h.b16 %v806
  %v1183 = vunpack.c.l.b16 %v807
  %v1184 = vunpack.c.h.b16 %v807
  %v1185 = vunpack.c.l.b16 %v808
  %v1186 = vunpack.c.h.b16 %v808
  %v1187 = vunpack.c.l.b16 %v809
  %v1188 = vunpack.c.h.b16 %v809
  %v1189 = vunpack.c.l.b16 %v810
  %v1190 = vunpack.c.h.b16 %v810
  %v1191 = vunpack.c.l.b16 %v811
  %v1192 = vunpack.c.h.b16 %v811
  %v1193 = vunpack.c.l.b16 %v812
  %v1194 = vunpack.c.h.b16 %v812
  %v1195 = vunpack.c.l.b16 %v813
  %v1196 = vunpack.c.h.b16 %v813
  %v1197 = vunpack.c.l.b16 %v814
  %v1198 = vunpack.c.h.b16 %v814
  %v1199 = vpack.c.b16 %v947, %v943
  %v1200 = vpack.c.b16 %v948, %v944
  %v1201 = vpack.c.b16 %v949, %v945
  %v1202 = vpack.c.b16 %v950, %v946
  %v1203 = vpack.c.b16 %v955, %v951
  %v1204 = vpack.c.b16 %v956, %v952
  %v1205 = vpack.c.b16 %v957, %v953
  %v1206 = vpack.c.b16 %v958, %v954
  %v1207 = vpack.c.b16 %v963, %v959
  %v1208 = vpack.c.b16 %v964, %v960
  %v1209 = vpack.c.b16 %v965, %v961
  %v1210 = vpack.c.b16 %v966, %v962
  %v1211 = vpack.c.b16 %v971, %v967
  %v1212 = vpack.c.b16 %v972, %v968
  %v1213 = vpack.c.b16 %v973, %v969
  %v1214 = vpack.c.b16 %v974, %v970
  %v1215 = vpack.c.b16 %v979, %v975
  %v1216 = vpack.c.b16 %v980, %v976
  %v1217 = vpack.c.b16 %v981, %v977
  %v1218 = vpack.c.b16 %v982, %v978
  %v1219 = vpack.c.b16 %v987, %v983
  %v1220 = vpack.c.b16 %v988, %v984
  %v1221 = vpack.c.b16 %v989, %v985
  %v1222 = vpack.c.b16 %v990, %v986
  %v1223 = vpack.c.b16 %v995, %v991
  %v1224 = vpack.c.b16 %v996, %v992
  %v1225 = vpack.c.b16 %v997, %v993
  %v1226 = vpack.c.b16 %v998, %v994
  %v1227 = vpack.c.b16 %v1003, %v999
  %v1228 = vpack.c.b16 %v1004, %v1000
  %v1229 = vpack.c.b16 %v1005, %v1001
  %v1230 = vpack.c.b16 %v1006, %v1002
  %v1231 = vpack.c.b16 %v1011, %v1007
  %v1232 = vpack.c.b16 %v1012, %v1008
  %v1233 = vpack.c.b16 %v1013, %v1009
  %v1234 = vpack.c.b16 %v1014, %v1010
  %v1235 = vpack.c.b16 %v1019, %v1015
  %v1236 = vpack.c.b16 %v1020, %v1016
  %v1237 = vpack.c.b16 %v1021, %v1017
  %v1238 = vpack.c.b16 %v1022, %v1018
  %v1239 = vpack.c.b16 %v1027, %v1023
  %v1240 = vpack.c.b16 %v1028, %v1024
  %v1241 = vpack.c.b16 %v1029, %v1025
  %v1242 = vpack.c.b16 %v1030, %v1026
  %v1243 = vpack.c.b16 %v1035, %v1031
  %v1244 = vpack.c.b16 %v1036, %v1032
  %v1245 = vpack.c.b16 %v1037, %v1033
  %v1246 = vpack.c.b16 %v1038, %v1034
  %v1247 = vpack.c.b16 %v1043, %v1039
  %v1248 = vpack.c.b16 %v1044, %v1040
  %v1249 = vpack.c.b16 %v1045, %v1041
  %v1250 = vpack.c.b16 %v1046, %v1042
  %v1251 = vpack.c.b16 %v1051, %v1047
  %v1252 = vpack.c.b16 %v1052, %v1048
  %v1253 = vpack.c.b16 %v1053, %v1049
  %v1254 = vpack.c.b16 %v1054, %v1050
  %v1255 = vpack.c.b16 %v1059, %v1055
  %v1256 = vpack.c.b16 %v1060, %v1056
  %v1257 = vpack.c.b16 %v1061, %v1057
  %v1258 = vpack.c.b16 %v1062, %v1058
  %v1259 = vpack.c.b16 %v1067, %v1063
  %v1260 = vpack.c.b16 %v1068, %v1064
  %v1261 = vpack.c.b16 %v1069, %v1065
  %v1262 = vpack.c.b16 %v1070, %v1066
  %v1263 = vpack.c.b16 %v1075, %v1071
  %v1264 = vpack.c.b16 %v1076, %v1072
  %v1265 = vpack.c.b16 %v1077, %v1073
  %v1266 = vpack.c.b16 %v1078, %v1074
  %v1267 = vpack.c.b16 %v1083, %v1079
  %v1268 = vpack.c.b16 %v1084, %v1080
  %v1269 = vpack.c.b16 %v1085, %v1081
  %v1270 = vpack.c.b16 %v1086, %v1082
  %v1271 = vpack.c.b16 %v1091, %v1087
  %v1272 = vpack.c.b16 %v1092, %v1088
  %v1273 = vpack.c.b16 %v1093, %v1089
  %v1274 = vpack.c.b16 %v1094, %v1090
  %v1275 = vpack.c.b16 %v1099, %v1095
  %v1276 = vpack.c.b16 %v1100, %v1096
  %v1277 = vpack.c.b16 %v1101, %v1097
  %v1278 = vpack.c.b16 %v1102, %v1098
  %v1279 = vpack.c.b16 %v1107, %v1103
  %v1280 = vpack.c.b16 %v1108, %v1104
  %v1281 = vpack.c.b16 %v1109, %v1105
  %v1282 = vpack.c.b16 %v1110, %v1106
  %v1283 = vpack.c.b16 %v1115, %v1111
  %v1284 = vpack.c.b16 %v1116, %v1112
  %v1285 = vpack.c.b16 %v1117, %v1113
  %v1286 = vpack.c.b16 %v1118, %v1114
  %v1287 = vpack.c.b16 %v1123, %v1119
  %v1288 = vpack.c.b16 %v1124, %v1120
  %v1289 = vpack.c.b16 %v1125, %v1121
  %v1290 = vpack.c.b16 %v1126, %v1122
  %v1291 = vpack.c.b16 %v1131, %v1127
  %v1292 = vpack.c.b16 %v1132, %v1128
  %v1293 = vpack.c.b16 %v1133, %v1129
  %v1294 = vpack.c.b16 %v1134, %v1130
  %v1295 = vpack.c.b16 %v1139, %v1135
  %v1296 = vpack.c.b16 %v1140, %v1136
  %v1297 = vpack.c.b16 %v1141, %v1137
  %v1298 = vpack.c.b16 %v1142, %v1138
  %v1299 = vpack.c.b16 %v1147, %v1143
  %v1300 = vpack.c.b16 %v1148, %v1144
  %v1301 = vpack.c.b16 %v1149, %v1145
  %v1302 = vpack.c.b16 %v1150, %v1146
  %v1303 = vpack.c.b16 %v1155, %v1151
  %v1304 = vpack.c.b16 %v1156, %v1152
  %v1305 = vpack.c.b16 %v1157, %v1153
  %v1306 = vpack.c.b16 %v1158, %v1154
  %v1307 = vpack.c.b16 %v1163, %v1159
  %v1308 = vpack.c.b16 %v1164, %v1160
  %v1309 = vpack.c.b16 %v1165, %v1161
  %v1310 = vpack.c.b16 %v1166, %v1162
  %v1311 = vpack.c.b16 %v1171, %v1167
  %v1312 = vpack.c.b16 %v1172, %v1168
  %v1313 = vpack.c.b16 %v1173, %v1169
  %v1314 = vpack.c.b16 %v1174, %v1170
  %v1315 = vpack.c.b16 %v1179, %v1175
  %v1316 = vpack.c.b16 %v1180, %v1176
  %v1317 = vpack.c.b16 %v1181, %v1177
  %v1318 = vpack.c.b16 %v1182, %v1178
  %v1319 = vpack.c.b16 %v1187, %v1183
  %v1320 = vpack.c.b16 %v1188, %v1184
  %v1321 = vpack.c.b16 %v1189, %v1185
  %v1322 = vpack.c.b16 %v1190, %v1186
  %v1323 = vpack.c.b16 %v1195, %v1191
  %v1324 = vpack.c.b16 %v1196, %v1192
  %v1325 = vpack.c.b16 %v1197, %v1193
  %v1326 = vpack.c.b16 %v1198, %v1194
  %1455 = vmatprep.subr.bf16.mxu0 %v1200
  %1456 = vmatpush1.bf16.msra.mxu0 %v1199
  %1457 = vmatprep.subr.bf16.mxu0 %v1204
  %1458 = vmatpush1.bf16.msra.mxu0 %v1203
  %1459 = vmatprep.subr.bf16.mxu0 %v1208
  %1460 = vmatpush1.bf16.msra.mxu0 %v1207
  %1461 = vmatprep.subr.bf16.mxu0 %v1212
  %1462 = vmatpush1.bf16.msra.mxu0 %v1211
  %1463 = vmatprep.subr.bf16.mxu0 %v1216
  %1464 = vmatpush1.bf16.msra.mxu0 %v1215
  %1465 = vmatprep.subr.bf16.mxu0 %v1220
  %1466 = vmatpush1.bf16.msra.mxu0 %v1219
  %1467 = vmatprep.subr.bf16.mxu0 %v1224
  %1468 = vmatpush1.bf16.msra.mxu0 %v1223
  %1469 = vmatprep.subr.bf16.mxu0 %v1228
  %1470 = vmatpush1.bf16.msra.mxu0 %v1227
  %1471 = vmatprep.subr.bf16.mxu0 %v1232
  %1472 = vmatpush1.bf16.msra.mxu0 %v1231
  %1473 = vmatprep.subr.bf16.mxu0 %v1236
  %1474 = vmatpush1.bf16.msra.mxu0 %v1235
  %1475 = vmatprep.subr.bf16.mxu0 %v1240
  %1476 = vmatpush1.bf16.msra.mxu0 %v1239
  %1477 = vmatprep.subr.bf16.mxu0 %v1244
  %1478 = vmatpush1.bf16.msra.mxu0 %v1243
  %1479 = vmatprep.subr.bf16.mxu0 %v1248
  %1480 = vmatpush1.bf16.msra.mxu0 %v1247
  %1481 = vmatprep.subr.bf16.mxu0 %v1252
  %1482 = vmatpush1.bf16.msra.mxu0 %v1251
  %1483 = vmatprep.subr.bf16.mxu0 %v1256
  %1484 = vmatpush1.bf16.msra.mxu0 %v1255
  %1485 = vmatprep.subr.bf16.mxu0 %v1260
  %1486 = vmatpush1.bf16.msra.mxu0 %v1259
  %1487 = vmatprep.mubr.bf16.mxu0 %v684
  %1488 = vmatmul.mubr.bf16.gmra.mrb[0].mxu0 %v683
  %v1489 = vpop.f32.mrb[0].mxu0
  %v1490 = vadd.f32 0.0, %v1489
  %v1491 = vpop.f32.mrb[0].mxu0
  %v1492 = vadd.f32 0.0, %v1491
  %v1493 = vpop.f32.mrb[0].mxu0
  %v1494 = vadd.f32 0.0, %v1493
  %v1495 = vpop.f32.mrb[0].mxu0
  %v1496 = vadd.f32 0.0, %v1495
  %1497 = vdwg.mxu0
  %1498 = vmatprep.subr.bf16.mxu0 %v1264
  %1499 = vmatpush1.bf16.msra.mxu0 %v1263
  %1500 = vmatprep.subr.bf16.mxu0 %v1268
  %1501 = vmatpush1.bf16.msra.mxu0 %v1267
  %1502 = vmatprep.subr.bf16.mxu0 %v1272
  %1503 = vmatpush1.bf16.msra.mxu0 %v1271
  %1504 = vmatprep.subr.bf16.mxu0 %v1276
  %1505 = vmatpush1.bf16.msra.mxu0 %v1275
  %1506 = vmatprep.subr.bf16.mxu0 %v1280
  %1507 = vmatpush1.bf16.msra.mxu0 %v1279
  %1508 = vmatprep.subr.bf16.mxu0 %v1284
  %1509 = vmatpush1.bf16.msra.mxu0 %v1283
  %1510 = vmatprep.subr.bf16.mxu0 %v1288
  %1511 = vmatpush1.bf16.msra.mxu0 %v1287
  %1512 = vmatprep.subr.bf16.mxu0 %v1292
  %1513 = vmatpush1.bf16.msra.mxu0 %v1291
  %1514 = vmatprep.subr.bf16.mxu0 %v1296
  %1515 = vmatpush1.bf16.msra.mxu0 %v1295
  %1516 = vmatprep.subr.bf16.mxu0 %v1300
  %1517 = vmatpush1.bf16.msra.mxu0 %v1299
  %1518 = vmatprep.subr.bf16.mxu0 %v1304
  %1519 = vmatpush1.bf16.msra.mxu0 %v1303
  %1520 = vmatprep.subr.bf16.mxu0 %v1308
  %1521 = vmatpush1.bf16.msra.mxu0 %v1307
  %1522 = vmatprep.subr.bf16.mxu0 %v1312
  %1523 = vmatpush1.bf16.msra.mxu0 %v1311
  %1524 = vmatprep.subr.bf16.mxu0 %v1316
  %1525 = vmatpush1.bf16.msra.mxu0 %v1315
  %1526 = vmatprep.subr.bf16.mxu0 %v1320
  %1527 = vmatpush1.bf16.msra.mxu0 %v1319
  %1528 = vmatprep.subr.bf16.mxu0 %v1324
  %1529 = vmatpush1.bf16.msra.mxu0 %v1323
  %1530 = vmatprep.mubr.bf16.mxu0 %v686
  %1531 = vmatmul.mubr.bf16.gmra.mrb[0].mxu0 %v685
  %v1532 = vpop.f32.mrb[0].mxu0
  %v1533 = vadd.f32 %v1490, %v1532
  %v1534 = vpop.f32.mrb[0].mxu0
  %v1535 = vadd.f32 %v1492, %v1534
  %v1536 = vpop.f32.mrb[0].mxu0
  %v1537 = vadd.f32 %v1494, %v1536
  %v1538 = vpop.f32.mrb[0].mxu0
  %v1539 = vadd.f32 %v1496, %v1538
  %1540 = vdwg.mxu0
  %1541 = vmatprep.subr.bf16.mxu0 %v1202
  %1542 = vmatpush1.bf16.msra.mxu0 %v1201
  %1543 = vmatprep.subr.bf16.mxu0 %v1206
  %1544 = vmatpush1.bf16.msra.mxu0 %v1205
  %1545 = vmatprep.subr.bf16.mxu0 %v1210
  %1546 = vmatpush1.bf16.msra.mxu0 %v1209
  %1547 = vmatprep.subr.bf16.mxu0 %v1214
  %1548 = vmatpush1.bf16.msra.mxu0 %v1213
  %1549 = vmatprep.subr.bf16.mxu0 %v1218
  %1550 = vmatpush1.bf16.msra.mxu0 %v1217
  %1551 = vmatprep.subr.bf16.mxu0 %v1222
  %1552 = vmatpush1.bf16.msra.mxu0 %v1221
  %1553 = vmatprep.subr.bf16.mxu0 %v1226
  %1554 = vmatpush1.bf16.msra.mxu0 %v1225
  %1555 = vmatprep.subr.bf16.mxu0 %v1230
  %1556 = vmatpush1.bf16.msra.mxu0 %v1229
  %1557 = vmatprep.subr.bf16.mxu0 %v1234
  %1558 = vmatpush1.bf16.msra.mxu0 %v1233
  %1559 = vmatprep.subr.bf16.mxu0 %v1238
  %1560 = vmatpush1.bf16.msra.mxu0 %v1237
  %1561 = vmatprep.subr.bf16.mxu0 %v1242
  %1562 = vmatpush1.bf16.msra.mxu0 %v1241
  %1563 = vmatprep.subr.bf16.mxu0 %v1246
  %1564 = vmatpush1.bf16.msra.mxu0 %v1245
  %1565 = vmatprep.subr.bf16.mxu0 %v1250
  %1566 = vmatpush1.bf16.msra.mxu0 %v1249
  %1567 = vmatprep.subr.bf16.mxu0 %v1254
  %1568 = vmatpush1.bf16.msra.mxu0 %v1253
  %1569 = vmatprep.subr.bf16.mxu0 %v1258
  %1570 = vmatpush1.bf16.msra.mxu0 %v1257
  %1571 = vmatprep.subr.bf16.mxu0 %v1262
  %1572 = vmatpush1.bf16.msra.mxu0 %v1261
  %1573 = vmatprep.mubr.bf16.mxu0 %v684
  %1574 = vmatmul.mubr.bf16.gmra.mrb[0].mxu0 %v683
  %v1575 = vpop.f32.mrb[0].mxu0
  %v1576 = vadd.f32 0.0, %v1575
  %v1577 = vpop.f32.mrb[0].mxu0
  %v1578 = vadd.f32 0.0, %v1577
  %v1579 = vpop.f32.mrb[0].mxu0
  %v1580 = vadd.f32 0.0, %v1579
  %v1581 = vpop.f32.mrb[0].mxu0
  %v1582 = vadd.f32 0.0, %v1581
  %1583 = vdwg.mxu0
  %1584 = vmatprep.subr.bf16.mxu0 %v1266
  %1585 = vmatpush1.bf16.msra.mxu0 %v1265
  %1586 = vmatprep.subr.bf16.mxu0 %v1270
  %1587 = vmatpush1.bf16.msra.mxu0 %v1269
  %1588 = vmatprep.subr.bf16.mxu0 %v1274
  %1589 = vmatpush1.bf16.msra.mxu0 %v1273
  %1590 = vmatprep.subr.bf16.mxu0 %v1278
  %1591 = vmatpush1.bf16.msra.mxu0 %v1277
  %1592 = vmatprep.subr.bf16.mxu0 %v1282
  %1593 = vmatpush1.bf16.msra.mxu0 %v1281
  %1594 = vmatprep.subr.bf16.mxu0 %v1286
  %1595 = vmatpush1.bf16.msra.mxu0 %v1285
  %1596 = vmatprep.subr.bf16.mxu0 %v1290
  %1597 = vmatpush1.bf16.msra.mxu0 %v1289
  %1598 = vmatprep.subr.bf16.mxu0 %v1294
  %1599 = vmatpush1.bf16.msra.mxu0 %v1293
  %1600 = vmatprep.subr.bf16.mxu0 %v1298
  %1601 = vmatpush1.bf16.msra.mxu0 %v1297
  %1602 = vmatprep.subr.bf16.mxu0 %v1302
  %1603 = vmatpush1.bf16.msra.mxu0 %v1301
  %1604 = vmatprep.subr.bf16.mxu0 %v1306
  %1605 = vmatpush1.bf16.msra.mxu0 %v1305
  %1606 = vmatprep.subr.bf16.mxu0 %v1310
  %1607 = vmatpush1.bf16.msra.mxu0 %v1309
  %1608 = vmatprep.subr.bf16.mxu0 %v1314
  %1609 = vmatpush1.bf16.msra.mxu0 %v1313
  %1610 = vmatprep.subr.bf16.mxu0 %v1318
  %1611 = vmatpush1.bf16.msra.mxu0 %v1317
  %1612 = vmatprep.subr.bf16.mxu0 %v1322
  %1613 = vmatpush1.bf16.msra.mxu0 %v1321
  %1614 = vmatprep.subr.bf16.mxu0 %v1326
  %1615 = vmatpush1.bf16.msra.mxu0 %v1325
  %1616 = vmatprep.mubr.bf16.mxu0 %v686
  %1617 = vmatmul.mubr.bf16.gmra.mrb[0].mxu0 %v685
  %v1618 = vpop.f32.mrb[0].mxu0
  %v1619 = vadd.f32 %v1576, %v1618
  %v1620 = vpop.f32.mrb[0].mxu0
  %v1621 = vadd.f32 %v1578, %v1620
  %v1622 = vpop.f32.mrb[0].mxu0
  %v1623 = vadd.f32 %v1580, %v1622
  %v1624 = vpop.f32.mrb[0].mxu0
  %v1625 = vadd.f32 %v1582, %v1624
  %1626 = vdwg.mxu0
  %v1627 = vpack.c.bf16 %v1537, %v1533
  %v1628 = vpack.c.bf16 %v1539, %v1535
  %v1629 = vpack.c.bf16 %v1623, %v1619
  %v1630 = vpack.c.bf16 %v1625, %v1621
  %v1631 = vld [vmem:[%s6] sm:$0xf]
  %v1634 = vunpack.c.l.s4 1966171168
  %v1635 = vunpack.c.0.s8 %v1634
  %v1636 = vlaneseq
  %v1637 = vshrl.u32 %v1636, 7
  %v1638 = vsub.s32 %v1635, %v1637
  %v1639 = vrot.slane %v1631, %v1638
  %v1640 = vcombine.high %v1639, %v1639
  %v1642 = vunpack.c.l.s4 1966171168
  %v1643 = vunpack.c.0.s8 %v1642
  %v1644 = vlaneseq
  %v1645 = vshrl.u32 %v1644, 7
  %v1646 = vsub.s32 %v1643, %v1645
  %v1647 = vrot.slane %v1639, %v1646
  %v1649 = vunpack.c.l.s4 1966171168
  %v1650 = vunpack.c.0.s8 %v1649
  %v1651 = vlaneseq
  %v1652 = vshrl.u32 %v1651, 7
  %v1653 = vsub.s32 %v1650, %v1652
  %v1654 = vrot.slane %v1640, %v1653
  %v1655 = vcombine.high %v1647, %v1647
  %v1656 = vcombine.high %v1654, %v1654
  %v1658 = vpack.i.b16 %v1647, %v1647
  %v1660 = vlaneseq
  %v1661 = vshrl.u32 %v1660, 7
  %v1662 = vsub.s32 0, %v1661
  %v1663 = vrot.slane %v1658, %v1662
  %v1665 = vpack.i.b16 %v1654, %v1654
  %v1667 = vlaneseq
  %v1668 = vshrl.u32 %v1667, 7
  %v1669 = vsub.s32 0, %v1668
  %v1670 = vrot.slane %v1665, %v1669
  %v1672 = vpack.i.b16 %v1655, %v1655
  %v1674 = vlaneseq
  %v1675 = vshrl.u32 %v1674, 7
  %v1676 = vsub.s32 0, %v1675
  %v1677 = vrot.slane %v1672, %v1676
  %v1679 = vpack.i.b16 %v1656, %v1656
  %v1681 = vlaneseq
  %v1682 = vshrl.u32 %v1681, 7
  %v1683 = vsub.s32 0, %v1682
  %v1684 = vrot.slane %v1679, %v1683
  %v1685 = vadd.bf16 %v1627, %v1663
  %v1686 = vadd.bf16 %v1628, %v1670
  %v1687 = vadd.bf16 %v1629, %v1677
  %v1688 = vadd.bf16 %v1630, %v1684
  %v1689 = vmax.bf16 %v1685, 0
  %v1690 = vmax.bf16 %v1686, 0
  %v1691 = vmax.bf16 %v1687, 0
  %v1692 = vmax.bf16 %v1688, 0
  %v1693 = vld [vmem:[%s7] sm:$0xf]
  %v1694 = vld [vmem:[%s7 + $0x4] sm:$0xf]
  %v1695 = vld [vmem:[%s7 + $0x8] sm:$0xf]
  %v1696 = vld [vmem:[%s7 + $0xc] sm:$0xf]
  %v1697 = vld [vmem:[%s7 + $0x10] sm:$0xf]
  %v1698 = vld [vmem:[%s7 + $0x14] sm:$0xf]
  %v1699 = vld [vmem:[%s7 + $0x18] sm:$0xf]
  %v1700 = vld [vmem:[%s7 + $0x1c] sm:$0xf]
  %v1701 = vld [vmem:[%s7 + $0x20] sm:$0xf]
  %v1702 = vld [vmem:[%s7 + $0x24] sm:$0xf]
  %v1703 = vld [vmem:[%s7 + $0x28] sm:$0xf]
  %v1704 = vld [vmem:[%s7 + $0x2c] sm:$0xf]
  %v1705 = vld [vmem:[%s7 + $0x30] sm:$0xf]
  %v1706 = vld [vmem:[%s7 + $0x34] sm:$0xf]
  %v1707 = vld [vmem:[%s7 + $0x38] sm:$0xf]
  %v1708 = vld [vmem:[%s7 + $0x3c] sm:$0xf]
  %v1709 = vld [vmem:[%s7 + $0x40] sm:$0xf]
  %v1710 = vld [vmem:[%s7 + $0x44] sm:$0xf]
  %v1711 = vld [vmem:[%s7 + $0x48] sm:$0xf]
  %v1712 = vld [vmem:[%s7 + $0x4c] sm:$0xf]
  %v1713 = vld [vmem:[%s7 + $0x50] sm:$0xf]
  %v1714 = vld [vmem:[%s7 + $0x54] sm:$0xf]
  %v1715 = vld [vmem:[%s7 + $0x58] sm:$0xf]
  %v1716 = vld [vmem:[%s7 + $0x5c] sm:$0xf]
  %v1717 = vld [vmem:[%s7 + $0x60] sm:$0xf]
  %v1718 = vld [vmem:[%s7 + $0x64] sm:$0xf]
  %v1719 = vld [vmem:[%s7 + $0x68] sm:$0xf]
  %v1720 = vld [vmem:[%s7 + $0x6c] sm:$0xf]
  %v1721 = vld [vmem:[%s7 + $0x70] sm:$0xf]
  %v1722 = vld [vmem:[%s7 + $0x74] sm:$0xf]
  %v1723 = vld [vmem:[%s7 + $0x78] sm:$0xf]
  %v1724 = vld [vmem:[%s7 + $0x7c] sm:$0xf]
  %v1725 = vld [vmem:[%s7 + $0x80] sm:$0xf]
  %v1726 = vld [vmem:[%s7 + $0x84] sm:$0xf]
  %v1727 = vld [vmem:[%s7 + $0x88] sm:$0xf]
  %v1728 = vld [vmem:[%s7 + $0x8c] sm:$0xf]
  %v1729 = vld [vmem:[%s7 + $0x90] sm:$0xf]
  %v1730 = vld [vmem:[%s7 + $0x94] sm:$0xf]
  %v1731 = vld [vmem:[%s7 + $0x98] sm:$0xf]
  %v1732 = vld [vmem:[%s7 + $0x9c] sm:$0xf]
  %v1733 = vld [vmem:[%s7 + $0xa0] sm:$0xf]
  %v1734 = vld [vmem:[%s7 + $0xa4] sm:$0xf]
  %v1735 = vld [vmem:[%s7 + $0xa8] sm:$0xf]
  %v1736 = vld [vmem:[%s7 + $0xac] sm:$0xf]
  %v1737 = vld [vmem:[%s7 + $0xb0] sm:$0xf]
  %v1738 = vld [vmem:[%s7 + $0xb4] sm:$0xf]
  %v1739 = vld [vmem:[%s7 + $0xb8] sm:$0xf]
  %v1740 = vld [vmem:[%s7 + $0xbc] sm:$0xf]
  %v1741 = vld [vmem:[%s7 + $0xc0] sm:$0xf]
  %v1742 = vld [vmem:[%s7 + $0xc4] sm:$0xf]
  %v1743 = vld [vmem:[%s7 + $0xc8] sm:$0xf]
  %v1744 = vld [vmem:[%s7 + $0xcc] sm:$0xf]
  %v1745 = vld [vmem:[%s7 + $0xd0] sm:$0xf]
  %v1746 = vld [vmem:[%s7 + $0xd4] sm:$0xf]
  %v1747 = vld [vmem:[%s7 + $0xd8] sm:$0xf]
  %v1748 = vld [vmem:[%s7 + $0xdc] sm:$0xf]
  %v1749 = vld [vmem:[%s7 + $0xe0] sm:$0xf]
  %v1750 = vld [vmem:[%s7 + $0xe4] sm:$0xf]
  %v1751 = vld [vmem:[%s7 + $0xe8] sm:$0xf]
  %v1752 = vld [vmem:[%s7 + $0xec] sm:$0xf]
  %v1753 = vld [vmem:[%s7 + $0xf0] sm:$0xf]
  %v1754 = vld [vmem:[%s7 + $0xf4] sm:$0xf]
  %v1755 = vld [vmem:[%s7 + $0xf8] sm:$0xf]
  %v1756 = vld [vmem:[%s7 + $0xfc] sm:$0xf]
  %v1757 = vld [vmem:[%s8] sm:$0x1]
  %v1759 = vlaneseq
  %v1760 = vshrl.u32 %v1759, 7
  %v1761 = vsub.s32 0, %v1760
  %v1762 = vrot.slane %v1757, %v1761
  %v1828 = vunpack.c.l.b16 %v1693
  %v1829 = vunpack.c.l.b16 %v1694
  %v1830 = vunpack.c.l.b16 %v1695
  %v1831 = vunpack.c.l.b16 %v1696
  %v1832 = vunpack.c.l.b16 %v1697
  %v1833 = vunpack.c.l.b16 %v1698
  %v1834 = vunpack.c.l.b16 %v1699
  %v1835 = vunpack.c.l.b16 %v1700
  %v1836 = vunpack.c.l.b16 %v1701
  %v1837 = vunpack.c.l.b16 %v1702
  %v1838 = vunpack.c.l.b16 %v1703
  %v1839 = vunpack.c.l.b16 %v1704
  %v1840 = vunpack.c.l.b16 %v1705
  %v1841 = vunpack.c.l.b16 %v1706
  %v1842 = vunpack.c.l.b16 %v1707
  %v1843 = vunpack.c.l.b16 %v1708
  %v1844 = vunpack.c.l.b16 %v1709
  %v1845 = vunpack.c.l.b16 %v1710
  %v1846 = vunpack.c.l.b16 %v1711
  %v1847 = vunpack.c.l.b16 %v1712
  %v1848 = vunpack.c.l.b16 %v1713
  %v1849 = vunpack.c.l.b16 %v1714
  %v1850 = vunpack.c.l.b16 %v1715
  %v1851 = vunpack.c.l.b16 %v1716
  %v1852 = vunpack.c.l.b16 %v1717
  %v1853 = vunpack.c.l.b16 %v1718
  %v1854 = vunpack.c.l.b16 %v1719
  %v1855 = vunpack.c.l.b16 %v1720
  %v1856 = vunpack.c.l.b16 %v1721
  %v1857 = vunpack.c.l.b16 %v1722
  %v1858 = vunpack.c.l.b16 %v1723
  %v1859 = vunpack.c.l.b16 %v1724
  %v1860 = vunpack.c.l.b16 %v1725
  %v1861 = vunpack.c.l.b16 %v1726
  %v1862 = vunpack.c.l.b16 %v1727
  %v1863 = vunpack.c.l.b16 %v1728
  %v1864 = vunpack.c.l.b16 %v1729
  %v1865 = vunpack.c.l.b16 %v1730
  %v1866 = vunpack.c.l.b16 %v1731
  %v1867 = vunpack.c.l.b16 %v1732
  %v1868 = vunpack.c.l.b16 %v1733
  %v1869 = vunpack.c.l.b16 %v1734
  %v1870 = vunpack.c.l.b16 %v1735
  %v1871 = vunpack.c.l.b16 %v1736
  %v1872 = vunpack.c.l.b16 %v1737
  %v1873 = vunpack.c.l.b16 %v1738
  %v1874 = vunpack.c.l.b16 %v1739
  %v1875 = vunpack.c.l.b16 %v1740
  %v1876 = vunpack.c.l.b16 %v1741
  %v1877 = vunpack.c.l.b16 %v1742
  %v1878 = vunpack.c.l.b16 %v1743
  %v1879 = vunpack.c.l.b16 %v1744
  %v1880 = vunpack.c.l.b16 %v1745
  %v1881 = vunpack.c.l.b16 %v1746
  %v1882 = vunpack.c.l.b16 %v1747
  %v1883 = vunpack.c.l.b16 %v1748
  %v1884 = vunpack.c.l.b16 %v1749
  %v1885 = vunpack.c.l.b16 %v1750
  %v1886 = vunpack.c.l.b16 %v1751
  %v1887 = vunpack.c.l.b16 %v1752
  %v1888 = vunpack.c.l.b16 %v1753
  %v1889 = vunpack.c.l.b16 %v1754
  %v1890 = vunpack.c.l.b16 %v1755
  %v1891 = vunpack.c.l.b16 %v1756
  %v1892 = vpack.c.b16 %v1829, %v1828
  %v1893 = vpack.c.b16 %v1831, %v1830
  %v1894 = vpack.c.b16 %v1833, %v1832
  %v1895 = vpack.c.b16 %v1835, %v1834
  %v1896 = vpack.c.b16 %v1837, %v1836
  %v1897 = vpack.c.b16 %v1839, %v1838
  %v1898 = vpack.c.b16 %v1841, %v1840
  %v1899 = vpack.c.b16 %v1843, %v1842
  %v1900 = vpack.c.b16 %v1845, %v1844
  %v1901 = vpack.c.b16 %v1847, %v1846
  %v1902 = vpack.c.b16 %v1849, %v1848
  %v1903 = vpack.c.b16 %v1851, %v1850
  %v1904 = vpack.c.b16 %v1853, %v1852
  %v1905 = vpack.c.b16 %v1855, %v1854
  %v1906 = vpack.c.b16 %v1857, %v1856
  %v1907 = vpack.c.b16 %v1859, %v1858
  %v1908 = vpack.c.b16 %v1861, %v1860
  %v1909 = vpack.c.b16 %v1863, %v1862
  %v1910 = vpack.c.b16 %v1865, %v1864
  %v1911 = vpack.c.b16 %v1867, %v1866
  %v1912 = vpack.c.b16 %v1869, %v1868
  %v1913 = vpack.c.b16 %v1871, %v1870
  %v1914 = vpack.c.b16 %v1873, %v1872
  %v1915 = vpack.c.b16 %v1875, %v1874
  %v1916 = vpack.c.b16 %v1877, %v1876
  %v1917 = vpack.c.b16 %v1879, %v1878
  %v1918 = vpack.c.b16 %v1881, %v1880
  %v1919 = vpack.c.b16 %v1883, %v1882
  %v1920 = vpack.c.b16 %v1885, %v1884
  %v1921 = vpack.c.b16 %v1887, %v1886
  %v1922 = vpack.c.b16 %v1889, %v1888
  %v1923 = vpack.c.b16 %v1891, %v1890
  %1956 = vmatprep.subr.bf16.mxu0 0
  %1957 = vmatpush1.bf16.msra.mxu0 %v1892
  %1958 = vmatprep.subr.bf16.mxu0 0
  %1959 = vmatpush1.bf16.msra.mxu0 %v1893
  %1960 = vmatprep.subr.bf16.mxu0 0
  %1961 = vmatpush1.bf16.msra.mxu0 %v1894
  %1962 = vmatprep.subr.bf16.mxu0 0
  %1963 = vmatpush1.bf16.msra.mxu0 %v1895
  %1964 = vmatprep.subr.bf16.mxu0 0
  %1965 = vmatpush1.bf16.msra.mxu0 %v1896
  %1966 = vmatprep.subr.bf16.mxu0 0
  %1967 = vmatpush1.bf16.msra.mxu0 %v1897
  %1968 = vmatprep.subr.bf16.mxu0 0
  %1969 = vmatpush1.bf16.msra.mxu0 %v1898
  %1970 = vmatprep.subr.bf16.mxu0 0
  %1971 = vmatpush1.bf16.msra.mxu0 %v1899
  %1972 = vmatprep.subr.bf16.mxu0 0
  %1973 = vmatpush1.bf16.msra.mxu0 %v1900
  %1974 = vmatprep.subr.bf16.mxu0 0
  %1975 = vmatpush1.bf16.msra.mxu0 %v1901
  %1976 = vmatprep.subr.bf16.mxu0 0
  %1977 = vmatpush1.bf16.msra.mxu0 %v1902
  %1978 = vmatprep.subr.bf16.mxu0 0
  %1979 = vmatpush1.bf16.msra.mxu0 %v1903
  %1980 = vmatprep.subr.bf16.mxu0 0
  %1981 = vmatpush1.bf16.msra.mxu0 %v1904
  %1982 = vmatprep.subr.bf16.mxu0 0
  %1983 = vmatpush1.bf16.msra.mxu0 %v1905
  %1984 = vmatprep.subr.bf16.mxu0 0
  %1985 = vmatpush1.bf16.msra.mxu0 %v1906
  %1986 = vmatprep.subr.bf16.mxu0 0
  %1987 = vmatpush1.bf16.msra.mxu0 %v1907
  %1988 = vmatprep.mubr.bf16.mxu0 %v1690
  %1989 = vmatmul.mubr.bf16.gmra.mrb[0].mxu0 %v1689
  %v1990 = vpop.f32.mrb[0].mxu0
  %v1991 = vadd.f32 %v1762, %v1990
  %v1992 = vpop.f32.mrb[0].mxu0
  %v1993 = vpop.f32.mrb[0].mxu0
  %v1994 = vadd.f32 %v1762, %v1993
  %v1995 = vpop.f32.mrb[0].mxu0
  %1996 = vdwg.mxu0
  %1997 = vmatprep.subr.bf16.mxu0 0
  %1998 = vmatpush1.bf16.msra.mxu0 %v1908
  %1999 = vmatprep.subr.bf16.mxu0 0
  %2000 = vmatpush1.bf16.msra.mxu0 %v1909
  %2001 = vmatprep.subr.bf16.mxu0 0
  %2002 = vmatpush1.bf16.msra.mxu0 %v1910
  %2003 = vmatprep.subr.bf16.mxu0 0
  %2004 = vmatpush1.bf16.msra.mxu0 %v1911
  %2005 = vmatprep.subr.bf16.mxu0 0
  %2006 = vmatpush1.bf16.msra.mxu0 %v1912
  %2007 = vmatprep.subr.bf16.mxu0 0
  %2008 = vmatpush1.bf16.msra.mxu0 %v1913
  %2009 = vmatprep.subr.bf16.mxu0 0
  %2010 = vmatpush1.bf16.msra.mxu0 %v1914
  %2011 = vmatprep.subr.bf16.mxu0 0
  %2012 = vmatpush1.bf16.msra.mxu0 %v1915
  %2013 = vmatprep.subr.bf16.mxu0 0
  %2014 = vmatpush1.bf16.msra.mxu0 %v1916
  %2015 = vmatprep.subr.bf16.mxu0 0
  %2016 = vmatpush1.bf16.msra.mxu0 %v1917
  %2017 = vmatprep.subr.bf16.mxu0 0
  %2018 = vmatpush1.bf16.msra.mxu0 %v1918
  %2019 = vmatprep.subr.bf16.mxu0 0
  %2020 = vmatpush1.bf16.msra.mxu0 %v1919
  %2021 = vmatprep.subr.bf16.mxu0 0
  %2022 = vmatpush1.bf16.msra.mxu0 %v1920
  %2023 = vmatprep.subr.bf16.mxu0 0
  %2024 = vmatpush1.bf16.msra.mxu0 %v1921
  %2025 = vmatprep.subr.bf16.mxu0 0
  %2026 = vmatpush1.bf16.msra.mxu0 %v1922
  %2027 = vmatprep.subr.bf16.mxu0 0
  %2028 = vmatpush1.bf16.msra.mxu0 %v1923
  %2029 = vmatprep.mubr.bf16.mxu0 %v1692
  %2030 = vmatmul.mubr.bf16.gmra.mrb[0].mxu0 %v1691
  %v2031 = vpop.f32.mrb[0].mxu0
  %v2032 = vadd.f32 %v1991, %v2031
  %v2033 = vpop.f32.mrb[0].mxu0
  %v2034 = vpop.f32.mrb[0].mxu0
  %v2035 = vadd.f32 %v1994, %v2034
  %v2036 = vpop.f32.mrb[0].mxu0
  %2037 = vdwg.mxu0
  %vm2038 = vcmask 64512
  %2039 = vst.msk [vmem:[%s9] sm:$0xff] %vm2038, %v2032
  %2040 = vst.msk [vmem:[%s9 + $0x8] sm:$0xff] %vm2038, %v2035
  // Predicated region
  $region38: #{pdqn_forward.1} parent=0 // pred_check
    _
  $region39: #{pdqn_forward.1} parent=0 // pred_check_branch
    %2042 = sbr.rel (0) target = $region41
  $region40: #{pdqn_forward.1} parent=0 // pred_region
    _
  $region41: #{pdqn_forward.1} parent=0 // pred_fallthru
    _
  // Predicated region
  $region42: #{pdqn_forward.1} parent=0 // pred_check
    _
  $region43: #{pdqn_forward.1} parent=0 // pred_check_branch
    %2044 = sbr.rel (0) target = $region45
  $region44: #{pdqn_forward.1} parent=0 // pred_region
    _
  $region45: #{pdqn_forward.1} parent=0 // pred_fallthru
    _

</llo_original>
